<compile_context>
chip_gen: v5e
topology: v5e:2x2
jax: 0.10.0
libtpu: 0.0.40
codegen_flags: <defaults>
</compile_context>

<pallas_src>
import functools

import numpy as np
import jax
import jax.numpy as jnp
from jax import lax
from jax.experimental import pallas as pl
from jax.experimental.pallas import tpu as pltpu


_UNROLL_MAX_T = 32  # fully unroll the time loop at trace time below this


# ----------------------------------------------------------------------------
# Pallas kernel: the whole bidirectional LSTM recurrence runs in one kernel.
# Shapes are small, so every operand lives fully in VMEM (no grid tiling).
# ----------------------------------------------------------------------------
def _bilstm_kernel(x_flat_ref, mask_ref,
                   w_ih_ref, b_ref, whf_ref, whb_ref,
                   out_ref, hn_ref, cn_ref,
                   xp_ref):
    T, Bp, H2 = out_ref.shape
    H = H2 // 2
    G = 4 * H          # per-direction gate width

    # ---- prologue: ONE fused input projection for both directions (bias
    # folded in once); a single big MXU matmul off the serial critical path.
    x = x_flat_ref[...]                                            # (T*Bp, E)
    xp_ref[...] = (jnp.dot(x, w_ih_ref[...],
                           preferred_element_type=jnp.float32) + b_ref[...])

    # recurrent weights loaded once, closed over by the step function
    whf = whf_ref[...]                                             # (H, 4H)
    whb = whb_ref[...]                                             # (H, 4H)

    def cell(gates, c_prev):
        # packed gate column order is [i, f, o, g]:
        #   one sigmoid over a contiguous 3H slab + one tanh over H.
        sg = jax.nn.sigmoid(gates[:, 0:3 * H])
        g = jnp.tanh(gates[:, 3 * H:4 * H])
        i = sg[:, 0:H]
        f = sg[:, H:2 * H]
        o = sg[:, 2 * H:3 * H]
        c_new = f * c_prev + i * g
        h_new = o * jnp.tanh(c_new)
        return h_new, c_new

    def step(s, carry):
        hf, cf, hb, cb = carry                     # register-carried states
        static = isinstance(s, int)

        # ---------- forward direction at t = s ----------
        t_f = s
        r_f = t_f * Bp if static else pl.multiple_of(t_f * Bp, Bp)
        gf = xp_ref[pl.ds(r_f, Bp), 0:G] + jnp.dot(
            hf, whf, preferred_element_type=jnp.float32)
        hf_new, cf_new = cell(gf, cf)
        m_f = mask_ref[pl.ds(r_f, Bp), :]          # (Bp, H), {0.0, 1.0}
        out_ref[t_f, :, 0:H] = m_f * hf_new        # zero on padded slots
        hf = hf + m_f * (hf_new - hf)
        cf = cf + m_f * (cf_new - cf)

        # ---------- backward direction at t = T - 1 - s ----------
        t_b = T - 1 - s
        r_b = t_b * Bp if static else pl.multiple_of(t_b * Bp, Bp)
        gb = xp_ref[pl.ds(r_b, Bp), G:2 * G] + jnp.dot(
            hb, whb, preferred_element_type=jnp.float32)
        hb_new, cb_new = cell(gb, cb)
        m_b = mask_ref[pl.ds(r_b, Bp), :]
        out_ref[t_b, :, H:2 * H] = m_b * hb_new
        hb = hb + m_b * (hb_new - hb)
        cb = cb + m_b * (cb_new - cb)

        return hf, cf, hb, cb

    z = jnp.zeros((Bp, H), jnp.float32)
    carry = (z, z, z, z)
    if T <= _UNROLL_MAX_T:
        for s in range(T):                         # full trace-time unroll
            carry = step(s, carry)
    else:
        carry = lax.fori_loop(0, T, step, carry, unroll=4)

    hf, cf, hb, cb = carry
    # final states, PyTorch layout: (num_directions, batch, hidden)
    hn_ref[0] = hf
    hn_ref[1] = hb
    cn_ref[0] = cf
    cn_ref[1] = cb


# ----------------------------------------------------------------------------
# Parameter packing (wrapper-side, zero runtime cost inside the kernel):
#   * gate rows [i, f, g, o] (PyTorch) -> columns [i, f, o, g]
#   * input weights for both directions concatenated to one (E, 8H) matrix
#   * b_ih + b_hh folded into one (1, 8H) bias
# ----------------------------------------------------------------------------
def _pack_params(params):
    H = params["w_hh_f"].shape[1]
    perm = np.concatenate([np.arange(0, 2 * H),          # i, f
                           np.arange(3 * H, 4 * H),      # o
                           np.arange(2 * H, 3 * H)])     # g

    def pack_dir(wi, wh, bi, bh):
        wi = jnp.asarray(wi, jnp.float32)[perm].T        # (E, 4H) cols [i f o g]
        wh = jnp.asarray(wh, jnp.float32)[perm].T        # (H, 4H)
        b = (jnp.asarray(bi, jnp.float32) + jnp.asarray(bh, jnp.float32))[perm]
        return wi, wh, b

    wif, whf, bf = pack_dir(params["w_ih_f"], params["w_hh_f"],
                            params["b_ih_f"], params["b_hh_f"])
    wib, whb, bb = pack_dir(params["w_ih_b"], params["w_hh_b"],
                            params["b_ih_b"], params["b_hh_b"])

    w_ih = jnp.concatenate([wif, wib], axis=1)           # (E, 8H)
    bias = jnp.concatenate([bf, bb]).reshape(1, 8 * H)   # (1, 8H)
    # TODO(synk): for v6e/v7x at larger shapes, store w_ih / w_hh / x in bf16
    # for the MXU (keep gate math + preferred_element_type in f32); skipped
    # here to preserve the tightened f32 numerics check.
    return w_ih, bias, whf, whb


# ----------------------------------------------------------------------------
# Wrapper (glue: batch padding, mask precompute, transpose / pallas_call)
# ----------------------------------------------------------------------------
def encoder_forward(params, embedded_inputs, input_lengths):
    """Equivalent of Encoder.forward (before trimming to max(len))."""
    B, T, E = embedded_inputs.shape
    H = params["w_hh_f"].shape[1]
    Bp = ((B + 7) // 8) * 8                      # sublane-pad the batch

    w_ih, bias, whf, whb = _pack_params(params)

    # time-major, batch padded, flattened to a lane-dense (T*Bp, E) slab
    x_tm = jnp.transpose(embedded_inputs, (1, 0, 2)).astype(jnp.float32)
    x_tm = jnp.pad(x_tm, ((0, 0), (0, Bp - B), (0, 0)))
    x_flat = x_tm.reshape(T * Bp, E)

    # precomputed {0,1} validity mask (t < len[b]) replicated over H lanes
    # TODO(synk): at large T*Bp*H (esp. v5e HBM BW) generate this in the kernel
    # prologue from a (Bp,) lens array instead of DMA-ing an H-replicated slab.
    lens = jnp.pad(input_lengths.astype(jnp.int32), (0, Bp - B))
    valid = jnp.arange(T, dtype=jnp.int32)[:, None] < lens[None, :]   # (T, Bp)
    mask = jnp.broadcast_to(valid[:, :, None], (T, Bp, H)).astype(jnp.float32)
    mask = mask.reshape(T * Bp, H)

    vmem = functools.partial(pl.BlockSpec, memory_space=pltpu.MemorySpace.VMEM)

    out_shapes = (
        jax.ShapeDtypeStruct((T, Bp, 2 * H), jnp.float32),  # outputs, time-major
        jax.ShapeDtypeStruct((2, Bp, H), jnp.float32),      # h_n
        jax.ShapeDtypeStruct((2, Bp, H), jnp.float32),      # c_n
    )

    # TODO(synk): for realistic T/B/H, tile the prologue projection over time
    # chunks and stream output tiles (v7x has only 64 MiB physical VMEM); and
    # on v7x run one direction per TensorCore via a size-2 "parallel" grid.
    outputs_tm, h_n, c_n = pl.pallas_call(
        _bilstm_kernel,
        out_shape=out_shapes,
        in_specs=[vmem()] * 6,
        out_specs=(vmem(), vmem(), vmem()),
        scratch_shapes=[pltpu.VMEM((T * Bp, 8 * H), jnp.float32)],  # fused gate proj
        compiler_params=pltpu.CompilerParams(
            vmem_limit_bytes=32 * 1024 * 1024),
    )(x_flat, mask, w_ih, bias, whf, whb)

    # module is batch_first=True -> return (B, T, 2H); if the downstream
    # consumer can take time-major (T, B, 2H) this relayout should be dropped.
    outputs = jnp.transpose(outputs_tm[:, :B], (1, 0, 2))
    return outputs, (h_n[:, :B], c_n[:, :B])


# ----------------------------------------------------------------------------
# Deterministic parameter init, PyTorch-native LSTM layout:
#   weight_ih (4H, E), weight_hh (4H, H), bias_ih/bias_hh (4H,), gates [i f g o],
#   all drawn U(-1/sqrt(H), 1/sqrt(H)).
# ----------------------------------------------------------------------------
def init_params(key, embedding_dim, hidden_size):
    E, H = embedding_dim, hidden_size
    k = 1.0 / np.sqrt(H)
    ks = jax.random.split(key, 8)
    u = lambda kk, shape: jax.random.uniform(kk, shape, jnp.float32, -k, k)
    return {
        "w_ih_f": u(ks[0], (4 * H, E)),
        "w_hh_f": u(ks[1], (4 * H, H)),
        "b_ih_f": u(ks[2], (4 * H,)),
        "b_hh_f": u(ks[3], (4 * H,)),
        "w_ih_b": u(ks[4], (4 * H, E)),
        "w_hh_b": u(ks[5], (4 * H, H)),
        "b_ih_b": u(ks[6], (4 * H,)),
        "b_hh_b": u(ks[7], (4 * H,)),
    }


# ----------------------------------------------------------------------------
# Pure NumPy reference (same math as packed bidirectional nn.LSTM), float64.
# Uses the PyTorch-native parameter layout (gate order [i f g o]).
# ----------------------------------------------------------------------------
def _np_cell(xt, h, c, wih, whh, b, H):
    g = xt @ wih.T + h @ whh.T + b
    sig = lambda z: 1.0 / (1.0 + np.exp(-z))
    i, f, gg, o = (sig(g[:H]), sig(g[H:2 * H]),
                   np.tanh(g[2 * H:3 * H]), sig(g[3 * H:4 * H]))
    c2 = f * c + i * gg
    return o * np.tanh(c2), c2


def ref_encoder(x, lengths, p):
    x = np.asarray(x, np.float64)
    B, T, E = x.shape
    H = p["w_hh_f"].shape[1]
    wf, uf = np.asarray(p["w_ih_f"], np.float64), np.asarray(p["w_hh_f"], np.float64)
    bf = np.asarray(p["b_ih_f"], np.float64) + np.asarray(p["b_hh_f"], np.float64)
    wb, ub = np.asarray(p["w_ih_b"], np.float64), np.asarray(p["w_hh_b"], np.float64)
    bb = np.asarray(p["b_ih_b"], np.float64) + np.asarray(p["b_hh_b"], np.float64)
    out = np.zeros((B, T, 2 * H))
    hn = np.zeros((2, B, H))
    cn = np.zeros((2, B, H))
    for b in range(B):
        L = int(lengths[b])
        h = np.zeros(H); c = np.zeros(H)
        for t in range(L):
            h, c = _np_cell(x[b, t], h, c, wf, uf, bf, H)
            out[b, t, :H] = h
        hn[0, b], cn[0, b] = h, c
        h = np.zeros(H); c = np.zeros(H)
        for t in range(L - 1, -1, -1):
            h, c = _np_cell(x[b, t], h, c, wb, ub, bb, H)
            out[b, t, H:] = h
        hn[1, b], cn[1, b] = h, c
    return out, hn, cn


if __name__ == "__main__":
    B, T, E, H = 2, 8, 16, 32
    key = jax.random.PRNGKey(0)
    kx, kp = jax.random.split(key)

    embedded_inputs = jax.random.normal(kx, (B, T, E), dtype=jnp.float32)
    input_lengths = jnp.array([8, 5], dtype=jnp.int32)   # sorted desc (enforce_sorted)
    params = init_params(kp, E, H)

    outputs, (h_n, c_n) = encoder_forward(params, embedded_inputs, input_lengths)
    outputs = jax.block_until_ready(outputs)
    h_n = jax.block_until_ready(h_n)
    c_n = jax.block_until_ready(c_n)

    # pad_packed_sequence trims the time axis to max(input_lengths)
    T_out = int(np.max(np.asarray(input_lengths)))
    outputs = outputs[:, :T_out]

    # correctness check against a float64 NumPy reference of the same
    # semantics; tolerance tightened from 2e-2 to 1e-4 (all-f32 kernel).
    ref_out, ref_hn, ref_cn = ref_encoder(np.asarray(embedded_inputs),
                                          np.asarray(input_lengths), params)
    np.testing.assert_allclose(np.asarray(outputs), ref_out[:, :T_out],
                               rtol=1e-4, atol=1e-4)
    np.testing.assert_allclose(np.asarray(h_n), ref_hn, rtol=1e-4, atol=1e-4)
    np.testing.assert_allclose(np.asarray(c_n), ref_cn, rtol=1e-4, atol=1e-4)

    print("KERNEL_OK")
</pallas_src>

<mosaic_0001>
module attributes {stable_mosaic.version = 11 : i64} {
  func.func @_bilstm_kernel(%arg0: memref<64x16xf32, #tpu.memory_space<vmem>>, %arg1: memref<64x32xf32, #tpu.memory_space<vmem>>, %arg2: memref<16x256xf32, #tpu.memory_space<vmem>>, %arg3: memref<1x256xf32, #tpu.memory_space<vmem>>, %arg4: memref<32x128xf32, #tpu.memory_space<vmem>>, %arg5: memref<32x128xf32, #tpu.memory_space<vmem>>, %arg6: memref<8x8x64xf32, #tpu.memory_space<vmem>>, %arg7: memref<2x8x32xf32, #tpu.memory_space<vmem>>, %arg8: memref<2x8x32xf32, #tpu.memory_space<vmem>>, %arg9: memref<64x256xf32, #tpu.memory_space<vmem>>) attributes {dimension_semantics = [], scalar_prefetch = 0 : i64, scratch_operands = 1 : i64, tpu.core_type = #tpu.core_type<tc>} {
    %c0 = arith.constant 0 : index
    %c0_0 = arith.constant 0 : index
    %0 = vector.load %arg0[%c0, %c0_0] : memref<64x16xf32, #tpu.memory_space<vmem>>, vector<64x16xf32>
    %c0_1 = arith.constant 0 : index
    %c0_2 = arith.constant 0 : index
    %1 = vector.load %arg2[%c0_1, %c0_2] : memref<16x256xf32, #tpu.memory_space<vmem>>, vector<16x256xf32>
    %cst = arith.constant dense<0.000000e+00> : vector<64x256xf32>
    %2 = tpu.matmul %0, %1, %cst {dimension_numbers = #tpu.dot_dimension_numbers<[1], [0], [0], [1], [0, 0, 1, 1], [], []>} : vector<64x16xf32>, vector<16x256xf32>, vector<64x256xf32> -> vector<64x256xf32>
    %c0_3 = arith.constant 0 : index
    %c0_4 = arith.constant 0 : index
    %3 = vector.load %arg3[%c0_3, %c0_4] : memref<1x256xf32, #tpu.memory_space<vmem>>, vector<1x256xf32>
    %4 = vector.broadcast %3 : vector<1x256xf32> to vector<64x256xf32>
    %5 = arith.addf %2, %4 : vector<64x256xf32>
    %c0_5 = arith.constant 0 : index
    %c0_6 = arith.constant 0 : index
    %6 = vector.load %arg9[%c0_5, %c0_6] : memref<64x256xf32, #tpu.memory_space<vmem>>, vector<64x256xf32>
    tpu.vector_store %arg9[%c0_5, %c0_6], %5 {strides = array<i32>} : memref<64x256xf32, #tpu.memory_space<vmem>>, vector<64x256xf32>,
    %c0_7 = arith.constant 0 : index
    %c0_8 = arith.constant 0 : index
    %7 = vector.load %arg4[%c0_7, %c0_8] : memref<32x128xf32, #tpu.memory_space<vmem>>, vector<32x128xf32>
    %c0_9 = arith.constant 0 : index
    %c0_10 = arith.constant 0 : index
    %8 = vector.load %arg5[%c0_9, %c0_10] : memref<32x128xf32, #tpu.memory_space<vmem>>, vector<32x128xf32>
    %cst_11 = arith.constant 0.000000e+00 : f32
    %9 = vector.broadcast %cst_11 : f32 to vector<8x32xf32>
    %c0_12 = arith.constant 0 : index
    %c0_13 = arith.constant 0 : index
    %10 = vector.load %arg9[%c0_12, %c0_13] : memref<64x256xf32, #tpu.memory_space<vmem>>, vector<8x128xf32>
    %cst_14 = arith.constant dense<0.000000e+00> : vector<8x128xf32>
    %11 = tpu.matmul %9, %7, %cst_14 {dimension_numbers = #tpu.dot_dimension_numbers<[1], [0], [0], [1], [0, 0, 1, 1], [], []>} : vector<8x32xf32>, vector<32x128xf32>, vector<8x128xf32> -> vector<8x128xf32>
    %12 = arith.addf %10, %11 : vector<8x128xf32>
    %13 = vector.extract_strided_slice %12 {offsets = [0, 0], sizes = [8, 96], strides = [1, 1]} : vector<8x128xf32> to vector<8x96xf32>
    %14 = arith.negf %13 : vector<8x96xf32>
    %15 = math.exp %14 : vector<8x96xf32>
    %cst_15 = arith.constant 1.000000e+00 : f32
    %16 = vector.broadcast %cst_15 : f32 to vector<8x96xf32>
    %17 = arith.addf %16, %15 : vector<8x96xf32>
    %18 = arith.divf %16, %17 : vector<8x96xf32>
    %19 = vector.extract_strided_slice %12 {offsets = [0, 96], sizes = [8, 32], strides = [1, 1]} : vector<8x128xf32> to vector<8x32xf32>
    %20 = math.tanh %19 : vector<8x32xf32>
    %21 = vector.extract_strided_slice %18 {offsets = [0, 0], sizes = [8, 32], strides = [1, 1]} : vector<8x96xf32> to vector<8x32xf32>
    %22 = vector.extract_strided_slice %18 {offsets = [0, 32], sizes = [8, 32], strides = [1, 1]} : vector<8x96xf32> to vector<8x32xf32>
    %23 = vector.extract_strided_slice %18 {offsets = [0, 64], sizes = [8, 32], strides = [1, 1]} : vector<8x96xf32> to vector<8x32xf32>
    %24 = arith.mulf %22, %9 : vector<8x32xf32>
    %25 = arith.mulf %21, %20 : vector<8x32xf32>
    %26 = arith.addf %24, %25 : vector<8x32xf32>
    %27 = math.tanh %26 : vector<8x32xf32>
    %28 = arith.mulf %23, %27 : vector<8x32xf32>
    %c0_16 = arith.constant 0 : index
    %c0_17 = arith.constant 0 : index
    %29 = vector.load %arg1[%c0_16, %c0_17] : memref<64x32xf32, #tpu.memory_space<vmem>>, vector<8x32xf32>
    %30 = arith.mulf %29, %28 : vector<8x32xf32>
    %c0_18 = arith.constant 0 : index
    %c0_19 = arith.constant 0 : index
    %c0_20 = arith.constant 0 : index
    %31 = vector.load %arg6[%c0_18, %c0_19, %c0_20] : memref<8x8x64xf32, #tpu.memory_space<vmem>>, vector<1x8x32xf32>
    %32 = vector.shape_cast %31 : vector<1x8x32xf32> to vector<8x32xf32>
    %33 = vector.shape_cast %30 : vector<8x32xf32> to vector<1x8x32xf32>
    tpu.vector_store %arg6[%c0_18, %c0_19, %c0_20], %33 {strides = array<i32>} : memref<8x8x64xf32, #tpu.memory_space<vmem>>, vector<1x8x32xf32>,
    %34 = arith.subf %28, %9 : vector<8x32xf32>
    %35 = arith.mulf %29, %34 : vector<8x32xf32>
    %36 = arith.addf %9, %35 : vector<8x32xf32>
    %37 = arith.subf %26, %9 : vector<8x32xf32>
    %38 = arith.mulf %29, %37 : vector<8x32xf32>
    %39 = arith.addf %9, %38 : vector<8x32xf32>
    %c56 = arith.constant 56 : index
    %c128 = arith.constant 128 : index
    %40 = vector.load %arg9[%c56, %c128] : memref<64x256xf32, #tpu.memory_space<vmem>>, vector<8x128xf32>
    %cst_21 = arith.constant dense<0.000000e+00> : vector<8x128xf32>
    %41 = tpu.matmul %9, %8, %cst_21 {dimension_numbers = #tpu.dot_dimension_numbers<[1], [0], [0], [1], [0, 0, 1, 1], [], []>} : vector<8x32xf32>, vector<32x128xf32>, vector<8x128xf32> -> vector<8x128xf32>
    %42 = arith.addf %40, %41 : vector<8x128xf32>
    %43 = vector.extract_strided_slice %42 {offsets = [0, 0], sizes = [8, 96], strides = [1, 1]} : vector<8x128xf32> to vector<8x96xf32>
    %44 = arith.negf %43 : vector<8x96xf32>
    %45 = math.exp %44 : vector<8x96xf32>
    %cst_22 = arith.constant 1.000000e+00 : f32
    %46 = vector.broadcast %cst_22 : f32 to vector<8x96xf32>
    %47 = arith.addf %46, %45 : vector<8x96xf32>
    %48 = arith.divf %46, %47 : vector<8x96xf32>
    %49 = vector.extract_strided_slice %42 {offsets = [0, 96], sizes = [8, 32], strides = [1, 1]} : vector<8x128xf32> to vector<8x32xf32>
    %50 = math.tanh %49 : vector<8x32xf32>
    %51 = vector.extract_strided_slice %48 {offsets = [0, 0], sizes = [8, 32], strides = [1, 1]} : vector<8x96xf32> to vector<8x32xf32>
    %52 = vector.extract_strided_slice %48 {offsets = [0, 32], sizes = [8, 32], strides = [1, 1]} : vector<8x96xf32> to vector<8x32xf32>
    %53 = vector.extract_strided_slice %48 {offsets = [0, 64], sizes = [8, 32], strides = [1, 1]} : vector<8x96xf32> to vector<8x32xf32>
    %54 = arith.mulf %52, %9 : vector<8x32xf32>
    %55 = arith.mulf %51, %50 : vector<8x32xf32>
    %56 = arith.addf %54, %55 : vector<8x32xf32>
    %57 = math.tanh %56 : vector<8x32xf32>
    %58 = arith.mulf %53, %57 : vector<8x32xf32>
    %c56_23 = arith.constant 56 : index
    %c0_24 = arith.constant 0 : index
    %59 = vector.load %arg1[%c56_23, %c0_24] : memref<64x32xf32, #tpu.memory_space<vmem>>, vector<8x32xf32>
    %60 = arith.mulf %59, %58 : vector<8x32xf32>
    %c7 = arith.constant 7 : index
    %c0_25 = arith.constant 0 : index
    %c32 = arith.constant 32 : index
    %61 = vector.load %arg6[%c7, %c0_25, %c32] : memref<8x8x64xf32, #tpu.memory_space<vmem>>, vector<1x8x32xf32>
    %62 = vector.shape_cast %61 : vector<1x8x32xf32> to vector<8x32xf32>
    %63 = vector.shape_cast %60 : vector<8x32xf32> to vector<1x8x32xf32>
    tpu.vector_store %arg6[%c7, %c0_25, %c32], %63 {strides = array<i32>} : memref<8x8x64xf32, #tpu.memory_space<vmem>>, vector<1x8x32xf32>,
    %64 = arith.subf %58, %9 : vector<8x32xf32>
    %65 = arith.mulf %59, %64 : vector<8x32xf32>
    %66 = arith.addf %9, %65 : vector<8x32xf32>
    %67 = arith.subf %56, %9 : vector<8x32xf32>
    %68 = arith.mulf %59, %67 : vector<8x32xf32>
    %69 = arith.addf %9, %68 : vector<8x32xf32>
    %c8 = arith.constant 8 : index
    %c0_26 = arith.constant 0 : index
    %70 = vector.load %arg9[%c8, %c0_26] : memref<64x256xf32, #tpu.memory_space<vmem>>, vector<8x128xf32>
    %cst_27 = arith.constant dense<0.000000e+00> : vector<8x128xf32>
    %71 = tpu.matmul %36, %7, %cst_27 {dimension_numbers = #tpu.dot_dimension_numbers<[1], [0], [0], [1], [0, 0, 1, 1], [], []>} : vector<8x32xf32>, vector<32x128xf32>, vector<8x128xf32> -> vector<8x128xf32>
    %72 = arith.addf %70, %71 : vector<8x128xf32>
    %73 = vector.extract_strided_slice %72 {offsets = [0, 0], sizes = [8, 96], strides = [1, 1]} : vector<8x128xf32> to vector<8x96xf32>
    %74 = arith.negf %73 : vector<8x96xf32>
    %75 = math.exp %74 : vector<8x96xf32>
    %cst_28 = arith.constant 1.000000e+00 : f32
    %76 = vector.broadcast %cst_28 : f32 to vector<8x96xf32>
    %77 = arith.addf %76, %75 : vector<8x96xf32>
    %78 = arith.divf %76, %77 : vector<8x96xf32>
    %79 = vector.extract_strided_slice %72 {offsets = [0, 96], sizes = [8, 32], strides = [1, 1]} : vector<8x128xf32> to vector<8x32xf32>
    %80 = math.tanh %79 : vector<8x32xf32>
    %81 = vector.extract_strided_slice %78 {offsets = [0, 0], sizes = [8, 32], strides = [1, 1]} : vector<8x96xf32> to vector<8x32xf32>
    %82 = vector.extract_strided_slice %78 {offsets = [0, 32], sizes = [8, 32], strides = [1, 1]} : vector<8x96xf32> to vector<8x32xf32>
    %83 = vector.extract_strided_slice %78 {offsets = [0, 64], sizes = [8, 32], strides = [1, 1]} : vector<8x96xf32> to vector<8x32xf32>
    %84 = arith.mulf %82, %39 : vector<8x32xf32>
    %85 = arith.mulf %81, %80 : vector<8x32xf32>
    %86 = arith.addf %84, %85 : vector<8x32xf32>
    %87 = math.tanh %86 : vector<8x32xf32>
    %88 = arith.mulf %83, %87 : vector<8x32xf32>
    %c8_29 = arith.constant 8 : index
    %c0_30 = arith.constant 0 : index
    %89 = vector.load %arg1[%c8_29, %c0_30] : memref<64x32xf32, #tpu.memory_space<vmem>>, vector<8x32xf32>
    %90 = arith.mulf %89, %88 : vector<8x32xf32>
    %c1 = arith.constant 1 : index
    %c0_31 = arith.constant 0 : index
    %c0_32 = arith.constant 0 : index
    %91 = vector.load %arg6[%c1, %c0_31, %c0_32] : memref<8x8x64xf32, #tpu.memory_space<vmem>>, vector<1x8x32xf32>
    %92 = vector.shape_cast %91 : vector<1x8x32xf32> to vector<8x32xf32>
    %93 = vector.shape_cast %90 : vector<8x32xf32> to vector<1x8x32xf32>
    tpu.vector_store %arg6[%c1, %c0_31, %c0_32], %93 {strides = array<i32>} : memref<8x8x64xf32, #tpu.memory_space<vmem>>, vector<1x8x32xf32>,
    %94 = arith.subf %88, %36 : vector<8x32xf32>
    %95 = arith.mulf %89, %94 : vector<8x32xf32>
    %96 = arith.addf %36, %95 : vector<8x32xf32>
    %97 = arith.subf %86, %39 : vector<8x32xf32>
    %98 = arith.mulf %89, %97 : vector<8x32xf32>
    %99 = arith.addf %39, %98 : vector<8x32xf32>
    %c48 = arith.constant 48 : index
    %c128_33 = arith.constant 128 : index
    %100 = vector.load %arg9[%c48, %c128_33] : memref<64x256xf32, #tpu.memory_space<vmem>>, vector<8x128xf32>
    %cst_34 = arith.constant dense<0.000000e+00> : vector<8x128xf32>
    %101 = tpu.matmul %66, %8, %cst_34 {dimension_numbers = #tpu.dot_dimension_numbers<[1], [0], [0], [1], [0, 0, 1, 1], [], []>} : vector<8x32xf32>, vector<32x128xf32>, vector<8x128xf32> -> vector<8x128xf32>
    %102 = arith.addf %100, %101 : vector<8x128xf32>
    %103 = vector.extract_strided_slice %102 {offsets = [0, 0], sizes = [8, 96], strides = [1, 1]} : vector<8x128xf32> to vector<8x96xf32>
    %104 = arith.negf %103 : vector<8x96xf32>
    %105 = math.exp %104 : vector<8x96xf32>
    %cst_35 = arith.constant 1.000000e+00 : f32
    %106 = vector.broadcast %cst_35 : f32 to vector<8x96xf32>
    %107 = arith.addf %106, %105 : vector<8x96xf32>
    %108 = arith.divf %106, %107 : vector<8x96xf32>
    %109 = vector.extract_strided_slice %102 {offsets = [0, 96], sizes = [8, 32], strides = [1, 1]} : vector<8x128xf32> to vector<8x32xf32>
    %110 = math.tanh %109 : vector<8x32xf32>
    %111 = vector.extract_strided_slice %108 {offsets = [0, 0], sizes = [8, 32], strides = [1, 1]} : vector<8x96xf32> to vector<8x32xf32>
    %112 = vector.extract_strided_slice %108 {offsets = [0, 32], sizes = [8, 32], strides = [1, 1]} : vector<8x96xf32> to vector<8x32xf32>
    %113 = vector.extract_strided_slice %108 {offsets = [0, 64], sizes = [8, 32], strides = [1, 1]} : vector<8x96xf32> to vector<8x32xf32>
    %114 = arith.mulf %112, %69 : vector<8x32xf32>
    %115 = arith.mulf %111, %110 : vector<8x32xf32>
    %116 = arith.addf %114, %115 : vector<8x32xf32>
    %117 = math.tanh %116 : vector<8x32xf32>
    %118 = arith.mulf %113, %117 : vector<8x32xf32>
    %c48_36 = arith.constant 48 : index
    %c0_37 = arith.constant 0 : index
    %119 = vector.load %arg1[%c48_36, %c0_37] : memref<64x32xf32, #tpu.memory_space<vmem>>, vector<8x32xf32>
    %120 = arith.mulf %119, %118 : vector<8x32xf32>
    %c6 = arith.constant 6 : index
    %c0_38 = arith.constant 0 : index
    %c32_39 = arith.constant 32 : index
    %121 = vector.load %arg6[%c6, %c0_38, %c32_39] : memref<8x8x64xf32, #tpu.memory_space<vmem>>, vector<1x8x32xf32>
    %122 = vector.shape_cast %121 : vector<1x8x32xf32> to vector<8x32xf32>
    %123 = vector.shape_cast %120 : vector<8x32xf32> to vector<1x8x32xf32>
    tpu.vector_store %arg6[%c6, %c0_38, %c32_39], %123 {strides = array<i32>} : memref<8x8x64xf32, #tpu.memory_space<vmem>>, vector<1x8x32xf32>,
    %124 = arith.subf %118, %66 : vector<8x32xf32>
    %125 = arith.mulf %119, %124 : vector<8x32xf32>
    %126 = arith.addf %66, %125 : vector<8x32xf32>
    %127 = arith.subf %116, %69 : vector<8x32xf32>
    %128 = arith.mulf %119, %127 : vector<8x32xf32>
    %129 = arith.addf %69, %128 : vector<8x32xf32>
    %c16 = arith.constant 16 : index
    %c0_40 = arith.constant 0 : index
    %130 = vector.load %arg9[%c16, %c0_40] : memref<64x256xf32, #tpu.memory_space<vmem>>, vector<8x128xf32>
    %cst_41 = arith.constant dense<0.000000e+00> : vector<8x128xf32>
    %131 = tpu.matmul %96, %7, %cst_41 {dimension_numbers = #tpu.dot_dimension_numbers<[1], [0], [0], [1], [0, 0, 1, 1], [], []>} : vector<8x32xf32>, vector<32x128xf32>, vector<8x128xf32> -> vector<8x128xf32>
    %132 = arith.addf %130, %131 : vector<8x128xf32>
    %133 = vector.extract_strided_slice %132 {offsets = [0, 0], sizes = [8, 96], strides = [1, 1]} : vector<8x128xf32> to vector<8x96xf32>
    %134 = arith.negf %133 : vector<8x96xf32>
    %135 = math.exp %134 : vector<8x96xf32>
    %cst_42 = arith.constant 1.000000e+00 : f32
    %136 = vector.broadcast %cst_42 : f32 to vector<8x96xf32>
    %137 = arith.addf %136, %135 : vector<8x96xf32>
    %138 = arith.divf %136, %137 : vector<8x96xf32>
    %139 = vector.extract_strided_slice %132 {offsets = [0, 96], sizes = [8, 32], strides = [1, 1]} : vector<8x128xf32> to vector<8x32xf32>
    %140 = math.tanh %139 : vector<8x32xf32>
    %141 = vector.extract_strided_slice %138 {offsets = [0, 0], sizes = [8, 32], strides = [1, 1]} : vector<8x96xf32> to vector<8x32xf32>
    %142 = vector.extract_strided_slice %138 {offsets = [0, 32], sizes = [8, 32], strides = [1, 1]} : vector<8x96xf32> to vector<8x32xf32>
    %143 = vector.extract_strided_slice %138 {offsets = [0, 64], sizes = [8, 32], strides = [1, 1]} : vector<8x96xf32> to vector<8x32xf32>
    %144 = arith.mulf %142, %99 : vector<8x32xf32>
    %145 = arith.mulf %141, %140 : vector<8x32xf32>
    %146 = arith.addf %144, %145 : vector<8x32xf32>
    %147 = math.tanh %146 : vector<8x32xf32>
    %148 = arith.mulf %143, %147 : vector<8x32xf32>
    %c16_43 = arith.constant 16 : index
    %c0_44 = arith.constant 0 : index
    %149 = vector.load %arg1[%c16_43, %c0_44] : memref<64x32xf32, #tpu.memory_space<vmem>>, vector<8x32xf32>
    %150 = arith.mulf %149, %148 : vector<8x32xf32>
    %c2 = arith.constant 2 : index
    %c0_45 = arith.constant 0 : index
    %c0_46 = arith.constant 0 : index
    %151 = vector.load %arg6[%c2, %c0_45, %c0_46] : memref<8x8x64xf32, #tpu.memory_space<vmem>>, vector<1x8x32xf32>
    %152 = vector.shape_cast %151 : vector<1x8x32xf32> to vector<8x32xf32>
    %153 = vector.shape_cast %150 : vector<8x32xf32> to vector<1x8x32xf32>
    tpu.vector_store %arg6[%c2, %c0_45, %c0_46], %153 {strides = array<i32>} : memref<8x8x64xf32, #tpu.memory_space<vmem>>, vector<1x8x32xf32>,
    %154 = arith.subf %148, %96 : vector<8x32xf32>
    %155 = arith.mulf %149, %154 : vector<8x32xf32>
    %156 = arith.addf %96, %155 : vector<8x32xf32>
    %157 = arith.subf %146, %99 : vector<8x32xf32>
    %158 = arith.mulf %149, %157 : vector<8x32xf32>
    %159 = arith.addf %99, %158 : vector<8x32xf32>
    %c40 = arith.constant 40 : index
    %c128_47 = arith.constant 128 : index
    %160 = vector.load %arg9[%c40, %c128_47] : memref<64x256xf32, #tpu.memory_space<vmem>>, vector<8x128xf32>
    %cst_48 = arith.constant dense<0.000000e+00> : vector<8x128xf32>
    %161 = tpu.matmul %126, %8, %cst_48 {dimension_numbers = #tpu.dot_dimension_numbers<[1], [0], [0], [1], [0, 0, 1, 1], [], []>} : vector<8x32xf32>, vector<32x128xf32>, vector<8x128xf32> -> vector<8x128xf32>
    %162 = arith.addf %160, %161 : vector<8x128xf32>
    %163 = vector.extract_strided_slice %162 {offsets = [0, 0], sizes = [8, 96], strides = [1, 1]} : vector<8x128xf32> to vector<8x96xf32>
    %164 = arith.negf %163 : vector<8x96xf32>
    %165 = math.exp %164 : vector<8x96xf32>
    %cst_49 = arith.constant 1.000000e+00 : f32
    %166 = vector.broadcast %cst_49 : f32 to vector<8x96xf32>
    %167 = arith.addf %166, %165 : vector<8x96xf32>
    %168 = arith.divf %166, %167 : vector<8x96xf32>
    %169 = vector.extract_strided_slice %162 {offsets = [0, 96], sizes = [8, 32], strides = [1, 1]} : vector<8x128xf32> to vector<8x32xf32>
    %170 = math.tanh %169 : vector<8x32xf32>
    %171 = vector.extract_strided_slice %168 {offsets = [0, 0], sizes = [8, 32], strides = [1, 1]} : vector<8x96xf32> to vector<8x32xf32>
    %172 = vector.extract_strided_slice %168 {offsets = [0, 32], sizes = [8, 32], strides = [1, 1]} : vector<8x96xf32> to vector<8x32xf32>
    %173 = vector.extract_strided_slice %168 {offsets = [0, 64], sizes = [8, 32], strides = [1, 1]} : vector<8x96xf32> to vector<8x32xf32>
    %174 = arith.mulf %172, %129 : vector<8x32xf32>
    %175 = arith.mulf %171, %170 : vector<8x32xf32>
    %176 = arith.addf %174, %175 : vector<8x32xf32>
    %177 = math.tanh %176 : vector<8x32xf32>
    %178 = arith.mulf %173, %177 : vector<8x32xf32>
    %c40_50 = arith.constant 40 : index
    %c0_51 = arith.constant 0 : index
    %179 = vector.load %arg1[%c40_50, %c0_51] : memref<64x32xf32, #tpu.memory_space<vmem>>, vector<8x32xf32>
    %180 = arith.mulf %179, %178 : vector<8x32xf32>
    %c5 = arith.constant 5 : index
    %c0_52 = arith.constant 0 : index
    %c32_53 = arith.constant 32 : index
    %181 = vector.load %arg6[%c5, %c0_52, %c32_53] : memref<8x8x64xf32, #tpu.memory_space<vmem>>, vector<1x8x32xf32>
    %182 = vector.shape_cast %181 : vector<1x8x32xf32> to vector<8x32xf32>
    %183 = vector.shape_cast %180 : vector<8x32xf32> to vector<1x8x32xf32>
    tpu.vector_store %arg6[%c5, %c0_52, %c32_53], %183 {strides = array<i32>} : memref<8x8x64xf32, #tpu.memory_space<vmem>>, vector<1x8x32xf32>,
    %184 = arith.subf %178, %126 : vector<8x32xf32>
    %185 = arith.mulf %179, %184 : vector<8x32xf32>
    %186 = arith.addf %126, %185 : vector<8x32xf32>
    %187 = arith.subf %176, %129 : vector<8x32xf32>
    %188 = arith.mulf %179, %187 : vector<8x32xf32>
    %189 = arith.addf %129, %188 : vector<8x32xf32>
    %c24 = arith.constant 24 : index
    %c0_54 = arith.constant 0 : index
    %190 = vector.load %arg9[%c24, %c0_54] : memref<64x256xf32, #tpu.memory_space<vmem>>, vector<8x128xf32>
    %cst_55 = arith.constant dense<0.000000e+00> : vector<8x128xf32>
    %191 = tpu.matmul %156, %7, %cst_55 {dimension_numbers = #tpu.dot_dimension_numbers<[1], [0], [0], [1], [0, 0, 1, 1], [], []>} : vector<8x32xf32>, vector<32x128xf32>, vector<8x128xf32> -> vector<8x128xf32>
    %192 = arith.addf %190, %191 : vector<8x128xf32>
    %193 = vector.extract_strided_slice %192 {offsets = [0, 0], sizes = [8, 96], strides = [1, 1]} : vector<8x128xf32> to vector<8x96xf32>
    %194 = arith.negf %193 : vector<8x96xf32>
    %195 = math.exp %194 : vector<8x96xf32>
    %cst_56 = arith.constant 1.000000e+00 : f32
    %196 = vector.broadcast %cst_56 : f32 to vector<8x96xf32>
    %197 = arith.addf %196, %195 : vector<8x96xf32>
    %198 = arith.divf %196, %197 : vector<8x96xf32>
    %199 = vector.extract_strided_slice %192 {offsets = [0, 96], sizes = [8, 32], strides = [1, 1]} : vector<8x128xf32> to vector<8x32xf32>
    %200 = math.tanh %199 : vector<8x32xf32>
    %201 = vector.extract_strided_slice %198 {offsets = [0, 0], sizes = [8, 32], strides = [1, 1]} : vector<8x96xf32> to vector<8x32xf32>
    %202 = vector.extract_strided_slice %198 {offsets = [0, 32], sizes = [8, 32], strides = [1, 1]} : vector<8x96xf32> to vector<8x32xf32>
    %203 = vector.extract_strided_slice %198 {offsets = [0, 64], sizes = [8, 32], strides = [1, 1]} : vector<8x96xf32> to vector<8x32xf32>
    %204 = arith.mulf %202, %159 : vector<8x32xf32>
    %205 = arith.mulf %201, %200 : vector<8x32xf32>
    %206 = arith.addf %204, %205 : vector<8x32xf32>
    %207 = math.tanh %206 : vector<8x32xf32>
    %208 = arith.mulf %203, %207 : vector<8x32xf32>
    %c24_57 = arith.constant 24 : index
    %c0_58 = arith.constant 0 : index
    %209 = vector.load %arg1[%c24_57, %c0_58] : memref<64x32xf32, #tpu.memory_space<vmem>>, vector<8x32xf32>
    %210 = arith.mulf %209, %208 : vector<8x32xf32>
    %c3 = arith.constant 3 : index
    %c0_59 = arith.constant 0 : index
    %c0_60 = arith.constant 0 : index
    %211 = vector.load %arg6[%c3, %c0_59, %c0_60] : memref<8x8x64xf32, #tpu.memory_space<vmem>>, vector<1x8x32xf32>
    %212 = vector.shape_cast %211 : vector<1x8x32xf32> to vector<8x32xf32>
    %213 = vector.shape_cast %210 : vector<8x32xf32> to vector<1x8x32xf32>
    tpu.vector_store %arg6[%c3, %c0_59, %c0_60], %213 {strides = array<i32>} : memref<8x8x64xf32, #tpu.memory_space<vmem>>, vector<1x8x32xf32>,
    %214 = arith.subf %208, %156 : vector<8x32xf32>
    %215 = arith.mulf %209, %214 : vector<8x32xf32>
    %216 = arith.addf %156, %215 : vector<8x32xf32>
    %217 = arith.subf %206, %159 : vector<8x32xf32>
    %218 = arith.mulf %209, %217 : vector<8x32xf32>
    %219 = arith.addf %159, %218 : vector<8x32xf32>
    %c32_61 = arith.constant 32 : index
    %c128_62 = arith.constant 128 : index
    %220 = vector.load %arg9[%c32_61, %c128_62] : memref<64x256xf32, #tpu.memory_space<vmem>>, vector<8x128xf32>
    %cst_63 = arith.constant dense<0.000000e+00> : vector<8x128xf32>
    %221 = tpu.matmul %186, %8, %cst_63 {dimension_numbers = #tpu.dot_dimension_numbers<[1], [0], [0], [1], [0, 0, 1, 1], [], []>} : vector<8x32xf32>, vector<32x128xf32>, vector<8x128xf32> -> vector<8x128xf32>
    %222 = arith.addf %220, %221 : vector<8x128xf32>
    %223 = vector.extract_strided_slice %222 {offsets = [0, 0], sizes = [8, 96], strides = [1, 1]} : vector<8x128xf32> to vector<8x96xf32>
    %224 = arith.negf %223 : vector<8x96xf32>
    %225 = math.exp %224 : vector<8x96xf32>
    %cst_64 = arith.constant 1.000000e+00 : f32
    %226 = vector.broadcast %cst_64 : f32 to vector<8x96xf32>
    %227 = arith.addf %226, %225 : vector<8x96xf32>
    %228 = arith.divf %226, %227 : vector<8x96xf32>
    %229 = vector.extract_strided_slice %222 {offsets = [0, 96], sizes = [8, 32], strides = [1, 1]} : vector<8x128xf32> to vector<8x32xf32>
    %230 = math.tanh %229 : vector<8x32xf32>
    %231 = vector.extract_strided_slice %228 {offsets = [0, 0], sizes = [8, 32], strides = [1, 1]} : vector<8x96xf32> to vector<8x32xf32>
    %232 = vector.extract_strided_slice %228 {offsets = [0, 32], sizes = [8, 32], strides = [1, 1]} : vector<8x96xf32> to vector<8x32xf32>
    %233 = vector.extract_strided_slice %228 {offsets = [0, 64], sizes = [8, 32], strides = [1, 1]} : vector<8x96xf32> to vector<8x32xf32>
    %234 = arith.mulf %232, %189 : vector<8x32xf32>
    %235 = arith.mulf %231, %230 : vector<8x32xf32>
    %236 = arith.addf %234, %235 : vector<8x32xf32>
    %237 = math.tanh %236 : vector<8x32xf32>
    %238 = arith.mulf %233, %237 : vector<8x32xf32>
    %c32_65 = arith.constant 32 : index
    %c0_66 = arith.constant 0 : index
    %239 = vector.load %arg1[%c32_65, %c0_66] : memref<64x32xf32, #tpu.memory_space<vmem>>, vector<8x32xf32>
    %240 = arith.mulf %239, %238 : vector<8x32xf32>
    %c4 = arith.constant 4 : index
    %c0_67 = arith.constant 0 : index
    %c32_68 = arith.constant 32 : index
    %241 = vector.load %arg6[%c4, %c0_67, %c32_68] : memref<8x8x64xf32, #tpu.memory_space<vmem>>, vector<1x8x32xf32>
    %242 = vector.shape_cast %241 : vector<1x8x32xf32> to vector<8x32xf32>
    %243 = vector.shape_cast %240 : vector<8x32xf32> to vector<1x8x32xf32>
    tpu.vector_store %arg6[%c4, %c0_67, %c32_68], %243 {strides = array<i32>} : memref<8x8x64xf32, #tpu.memory_space<vmem>>, vector<1x8x32xf32>,
    %244 = arith.subf %238, %186 : vector<8x32xf32>
    %245 = arith.mulf %239, %244 : vector<8x32xf32>
    %246 = arith.addf %186, %245 : vector<8x32xf32>
    %247 = arith.subf %236, %189 : vector<8x32xf32>
    %248 = arith.mulf %239, %247 : vector<8x32xf32>
    %249 = arith.addf %189, %248 : vector<8x32xf32>
    %c32_69 = arith.constant 32 : index
    %c0_70 = arith.constant 0 : index
    %250 = vector.load %arg9[%c32_69, %c0_70] : memref<64x256xf32, #tpu.memory_space<vmem>>, vector<8x128xf32>
    %cst_71 = arith.constant dense<0.000000e+00> : vector<8x128xf32>
    %251 = tpu.matmul %216, %7, %cst_71 {dimension_numbers = #tpu.dot_dimension_numbers<[1], [0], [0], [1], [0, 0, 1, 1], [], []>} : vector<8x32xf32>, vector<32x128xf32>, vector<8x128xf32> -> vector<8x128xf32>
    %252 = arith.addf %250, %251 : vector<8x128xf32>
    %253 = vector.extract_strided_slice %252 {offsets = [0, 0], sizes = [8, 96], strides = [1, 1]} : vector<8x128xf32> to vector<8x96xf32>
    %254 = arith.negf %253 : vector<8x96xf32>
    %255 = math.exp %254 : vector<8x96xf32>
    %cst_72 = arith.constant 1.000000e+00 : f32
    %256 = vector.broadcast %cst_72 : f32 to vector<8x96xf32>
    %257 = arith.addf %256, %255 : vector<8x96xf32>
    %258 = arith.divf %256, %257 : vector<8x96xf32>
    %259 = vector.extract_strided_slice %252 {offsets = [0, 96], sizes = [8, 32], strides = [1, 1]} : vector<8x128xf32> to vector<8x32xf32>
    %260 = math.tanh %259 : vector<8x32xf32>
    %261 = vector.extract_strided_slice %258 {offsets = [0, 0], sizes = [8, 32], strides = [1, 1]} : vector<8x96xf32> to vector<8x32xf32>
    %262 = vector.extract_strided_slice %258 {offsets = [0, 32], sizes = [8, 32], strides = [1, 1]} : vector<8x96xf32> to vector<8x32xf32>
    %263 = vector.extract_strided_slice %258 {offsets = [0, 64], sizes = [8, 32], strides = [1, 1]} : vector<8x96xf32> to vector<8x32xf32>
    %264 = arith.mulf %262, %219 : vector<8x32xf32>
    %265 = arith.mulf %261, %260 : vector<8x32xf32>
    %266 = arith.addf %264, %265 : vector<8x32xf32>
    %267 = math.tanh %266 : vector<8x32xf32>
    %268 = arith.mulf %263, %267 : vector<8x32xf32>
    %c32_73 = arith.constant 32 : index
    %c0_74 = arith.constant 0 : index
    %269 = vector.load %arg1[%c32_73, %c0_74] : memref<64x32xf32, #tpu.memory_space<vmem>>, vector<8x32xf32>
    %270 = arith.mulf %269, %268 : vector<8x32xf32>
    %c4_75 = arith.constant 4 : index
    %c0_76 = arith.constant 0 : index
    %c0_77 = arith.constant 0 : index
    %271 = vector.load %arg6[%c4_75, %c0_76, %c0_77] : memref<8x8x64xf32, #tpu.memory_space<vmem>>, vector<1x8x32xf32>
    %272 = vector.shape_cast %271 : vector<1x8x32xf32> to vector<8x32xf32>
    %273 = vector.shape_cast %270 : vector<8x32xf32> to vector<1x8x32xf32>
    tpu.vector_store %arg6[%c4_75, %c0_76, %c0_77], %273 {strides = array<i32>} : memref<8x8x64xf32, #tpu.memory_space<vmem>>, vector<1x8x32xf32>,
    %274 = arith.subf %268, %216 : vector<8x32xf32>
    %275 = arith.mulf %269, %274 : vector<8x32xf32>
    %276 = arith.addf %216, %275 : vector<8x32xf32>
    %277 = arith.subf %266, %219 : vector<8x32xf32>
    %278 = arith.mulf %269, %277 : vector<8x32xf32>
    %279 = arith.addf %219, %278 : vector<8x32xf32>
    %c24_78 = arith.constant 24 : index
    %c128_79 = arith.constant 128 : index
    %280 = vector.load %arg9[%c24_78, %c128_79] : memref<64x256xf32, #tpu.memory_space<vmem>>, vector<8x128xf32>
    %cst_80 = arith.constant dense<0.000000e+00> : vector<8x128xf32>
    %281 = tpu.matmul %246, %8, %cst_80 {dimension_numbers = #tpu.dot_dimension_numbers<[1], [0], [0], [1], [0, 0, 1, 1], [], []>} : vector<8x32xf32>, vector<32x128xf32>, vector<8x128xf32> -> vector<8x128xf32>
    %282 = arith.addf %280, %281 : vector<8x128xf32>
    %283 = vector.extract_strided_slice %282 {offsets = [0, 0], sizes = [8, 96], strides = [1, 1]} : vector<8x128xf32> to vector<8x96xf32>
    %284 = arith.negf %283 : vector<8x96xf32>
    %285 = math.exp %284 : vector<8x96xf32>
    %cst_81 = arith.constant 1.000000e+00 : f32
    %286 = vector.broadcast %cst_81 : f32 to vector<8x96xf32>
    %287 = arith.addf %286, %285 : vector<8x96xf32>
    %288 = arith.divf %286, %287 : vector<8x96xf32>
    %289 = vector.extract_strided_slice %282 {offsets = [0, 96], sizes = [8, 32], strides = [1, 1]} : vector<8x128xf32> to vector<8x32xf32>
    %290 = math.tanh %289 : vector<8x32xf32>
    %291 = vector.extract_strided_slice %288 {offsets = [0, 0], sizes = [8, 32], strides = [1, 1]} : vector<8x96xf32> to vector<8x32xf32>
    %292 = vector.extract_strided_slice %288 {offsets = [0, 32], sizes = [8, 32], strides = [1, 1]} : vector<8x96xf32> to vector<8x32xf32>
    %293 = vector.extract_strided_slice %288 {offsets = [0, 64], sizes = [8, 32], strides = [1, 1]} : vector<8x96xf32> to vector<8x32xf32>
    %294 = arith.mulf %292, %249 : vector<8x32xf32>
    %295 = arith.mulf %291, %290 : vector<8x32xf32>
    %296 = arith.addf %294, %295 : vector<8x32xf32>
    %297 = math.tanh %296 : vector<8x32xf32>
    %298 = arith.mulf %293, %297 : vector<8x32xf32>
    %c24_82 = arith.constant 24 : index
    %c0_83 = arith.constant 0 : index
    %299 = vector.load %arg1[%c24_82, %c0_83] : memref<64x32xf32, #tpu.memory_space<vmem>>, vector<8x32xf32>
    %300 = arith.mulf %299, %298 : vector<8x32xf32>
    %c3_84 = arith.constant 3 : index
    %c0_85 = arith.constant 0 : index
    %c32_86 = arith.constant 32 : index
    %301 = vector.load %arg6[%c3_84, %c0_85, %c32_86] : memref<8x8x64xf32, #tpu.memory_space<vmem>>, vector<1x8x32xf32>
    %302 = vector.shape_cast %301 : vector<1x8x32xf32> to vector<8x32xf32>
    %303 = vector.shape_cast %300 : vector<8x32xf32> to vector<1x8x32xf32>
    tpu.vector_store %arg6[%c3_84, %c0_85, %c32_86], %303 {strides = array<i32>} : memref<8x8x64xf32, #tpu.memory_space<vmem>>, vector<1x8x32xf32>,
    %304 = arith.subf %298, %246 : vector<8x32xf32>
    %305 = arith.mulf %299, %304 : vector<8x32xf32>
    %306 = arith.addf %246, %305 : vector<8x32xf32>
    %307 = arith.subf %296, %249 : vector<8x32xf32>
    %308 = arith.mulf %299, %307 : vector<8x32xf32>
    %309 = arith.addf %249, %308 : vector<8x32xf32>
    %c40_87 = arith.constant 40 : index
    %c0_88 = arith.constant 0 : index
    %310 = vector.load %arg9[%c40_87, %c0_88] : memref<64x256xf32, #tpu.memory_space<vmem>>, vector<8x128xf32>
    %cst_89 = arith.constant dense<0.000000e+00> : vector<8x128xf32>
    %311 = tpu.matmul %276, %7, %cst_89 {dimension_numbers = #tpu.dot_dimension_numbers<[1], [0], [0], [1], [0, 0, 1, 1], [], []>} : vector<8x32xf32>, vector<32x128xf32>, vector<8x128xf32> -> vector<8x128xf32>
    %312 = arith.addf %310, %311 : vector<8x128xf32>
    %313 = vector.extract_strided_slice %312 {offsets = [0, 0], sizes = [8, 96], strides = [1, 1]} : vector<8x128xf32> to vector<8x96xf32>
    %314 = arith.negf %313 : vector<8x96xf32>
    %315 = math.exp %314 : vector<8x96xf32>
    %cst_90 = arith.constant 1.000000e+00 : f32
    %316 = vector.broadcast %cst_90 : f32 to vector<8x96xf32>
    %317 = arith.addf %316, %315 : vector<8x96xf32>
    %318 = arith.divf %316, %317 : vector<8x96xf32>
    %319 = vector.extract_strided_slice %312 {offsets = [0, 96], sizes = [8, 32], strides = [1, 1]} : vector<8x128xf32> to vector<8x32xf32>
    %320 = math.tanh %319 : vector<8x32xf32>
    %321 = vector.extract_strided_slice %318 {offsets = [0, 0], sizes = [8, 32], strides = [1, 1]} : vector<8x96xf32> to vector<8x32xf32>
    %322 = vector.extract_strided_slice %318 {offsets = [0, 32], sizes = [8, 32], strides = [1, 1]} : vector<8x96xf32> to vector<8x32xf32>
    %323 = vector.extract_strided_slice %318 {offsets = [0, 64], sizes = [8, 32], strides = [1, 1]} : vector<8x96xf32> to vector<8x32xf32>
    %324 = arith.mulf %322, %279 : vector<8x32xf32>
    %325 = arith.mulf %321, %320 : vector<8x32xf32>
    %326 = arith.addf %324, %325 : vector<8x32xf32>
    %327 = math.tanh %326 : vector<8x32xf32>
    %328 = arith.mulf %323, %327 : vector<8x32xf32>
    %c40_91 = arith.constant 40 : index
    %c0_92 = arith.constant 0 : index
    %329 = vector.load %arg1[%c40_91, %c0_92] : memref<64x32xf32, #tpu.memory_space<vmem>>, vector<8x32xf32>
    %330 = arith.mulf %329, %328 : vector<8x32xf32>
    %c5_93 = arith.constant 5 : index
    %c0_94 = arith.constant 0 : index
    %c0_95 = arith.constant 0 : index
    %331 = vector.load %arg6[%c5_93, %c0_94, %c0_95] : memref<8x8x64xf32, #tpu.memory_space<vmem>>, vector<1x8x32xf32>
    %332 = vector.shape_cast %331 : vector<1x8x32xf32> to vector<8x32xf32>
    %333 = vector.shape_cast %330 : vector<8x32xf32> to vector<1x8x32xf32>
    tpu.vector_store %arg6[%c5_93, %c0_94, %c0_95], %333 {strides = array<i32>} : memref<8x8x64xf32, #tpu.memory_space<vmem>>, vector<1x8x32xf32>,
    %334 = arith.subf %328, %276 : vector<8x32xf32>
    %335 = arith.mulf %329, %334 : vector<8x32xf32>
    %336 = arith.addf %276, %335 : vector<8x32xf32>
    %337 = arith.subf %326, %279 : vector<8x32xf32>
    %338 = arith.mulf %329, %337 : vector<8x32xf32>
    %339 = arith.addf %279, %338 : vector<8x32xf32>
    %c16_96 = arith.constant 16 : index
    %c128_97 = arith.constant 128 : index
    %340 = vector.load %arg9[%c16_96, %c128_97] : memref<64x256xf32, #tpu.memory_space<vmem>>, vector<8x128xf32>
    %cst_98 = arith.constant dense<0.000000e+00> : vector<8x128xf32>
    %341 = tpu.matmul %306, %8, %cst_98 {dimension_numbers = #tpu.dot_dimension_numbers<[1], [0], [0], [1], [0, 0, 1, 1], [], []>} : vector<8x32xf32>, vector<32x128xf32>, vector<8x128xf32> -> vector<8x128xf32>
    %342 = arith.addf %340, %341 : vector<8x128xf32>
    %343 = vector.extract_strided_slice %342 {offsets = [0, 0], sizes = [8, 96], strides = [1, 1]} : vector<8x128xf32> to vector<8x96xf32>
    %344 = arith.negf %343 : vector<8x96xf32>
    %345 = math.exp %344 : vector<8x96xf32>
    %cst_99 = arith.constant 1.000000e+00 : f32
    %346 = vector.broadcast %cst_99 : f32 to vector<8x96xf32>
    %347 = arith.addf %346, %345 : vector<8x96xf32>
    %348 = arith.divf %346, %347 : vector<8x96xf32>
    %349 = vector.extract_strided_slice %342 {offsets = [0, 96], sizes = [8, 32], strides = [1, 1]} : vector<8x128xf32> to vector<8x32xf32>
    %350 = math.tanh %349 : vector<8x32xf32>
    %351 = vector.extract_strided_slice %348 {offsets = [0, 0], sizes = [8, 32], strides = [1, 1]} : vector<8x96xf32> to vector<8x32xf32>
    %352 = vector.extract_strided_slice %348 {offsets = [0, 32], sizes = [8, 32], strides = [1, 1]} : vector<8x96xf32> to vector<8x32xf32>
    %353 = vector.extract_strided_slice %348 {offsets = [0, 64], sizes = [8, 32], strides = [1, 1]} : vector<8x96xf32> to vector<8x32xf32>
    %354 = arith.mulf %352, %309 : vector<8x32xf32>
    %355 = arith.mulf %351, %350 : vector<8x32xf32>
    %356 = arith.addf %354, %355 : vector<8x32xf32>
    %357 = math.tanh %356 : vector<8x32xf32>
    %358 = arith.mulf %353, %357 : vector<8x32xf32>
    %c16_100 = arith.constant 16 : index
    %c0_101 = arith.constant 0 : index
    %359 = vector.load %arg1[%c16_100, %c0_101] : memref<64x32xf32, #tpu.memory_space<vmem>>, vector<8x32xf32>
    %360 = arith.mulf %359, %358 : vector<8x32xf32>
    %c2_102 = arith.constant 2 : index
    %c0_103 = arith.constant 0 : index
    %c32_104 = arith.constant 32 : index
    %361 = vector.load %arg6[%c2_102, %c0_103, %c32_104] : memref<8x8x64xf32, #tpu.memory_space<vmem>>, vector<1x8x32xf32>
    %362 = vector.shape_cast %361 : vector<1x8x32xf32> to vector<8x32xf32>
    %363 = vector.shape_cast %360 : vector<8x32xf32> to vector<1x8x32xf32>
    tpu.vector_store %arg6[%c2_102, %c0_103, %c32_104], %363 {strides = array<i32>} : memref<8x8x64xf32, #tpu.memory_space<vmem>>, vector<1x8x32xf32>,
    %364 = arith.subf %358, %306 : vector<8x32xf32>
    %365 = arith.mulf %359, %364 : vector<8x32xf32>
    %366 = arith.addf %306, %365 : vector<8x32xf32>
    %367 = arith.subf %356, %309 : vector<8x32xf32>
    %368 = arith.mulf %359, %367 : vector<8x32xf32>
    %369 = arith.addf %309, %368 : vector<8x32xf32>
    %c48_105 = arith.constant 48 : index
    %c0_106 = arith.constant 0 : index
    %370 = vector.load %arg9[%c48_105, %c0_106] : memref<64x256xf32, #tpu.memory_space<vmem>>, vector<8x128xf32>
    %cst_107 = arith.constant dense<0.000000e+00> : vector<8x128xf32>
    %371 = tpu.matmul %336, %7, %cst_107 {dimension_numbers = #tpu.dot_dimension_numbers<[1], [0], [0], [1], [0, 0, 1, 1], [], []>} : vector<8x32xf32>, vector<32x128xf32>, vector<8x128xf32> -> vector<8x128xf32>
    %372 = arith.addf %370, %371 : vector<8x128xf32>
    %373 = vector.extract_strided_slice %372 {offsets = [0, 0], sizes = [8, 96], strides = [1, 1]} : vector<8x128xf32> to vector<8x96xf32>
    %374 = arith.negf %373 : vector<8x96xf32>
    %375 = math.exp %374 : vector<8x96xf32>
    %cst_108 = arith.constant 1.000000e+00 : f32
    %376 = vector.broadcast %cst_108 : f32 to vector<8x96xf32>
    %377 = arith.addf %376, %375 : vector<8x96xf32>
    %378 = arith.divf %376, %377 : vector<8x96xf32>
    %379 = vector.extract_strided_slice %372 {offsets = [0, 96], sizes = [8, 32], strides = [1, 1]} : vector<8x128xf32> to vector<8x32xf32>
    %380 = math.tanh %379 : vector<8x32xf32>
    %381 = vector.extract_strided_slice %378 {offsets = [0, 0], sizes = [8, 32], strides = [1, 1]} : vector<8x96xf32> to vector<8x32xf32>
    %382 = vector.extract_strided_slice %378 {offsets = [0, 32], sizes = [8, 32], strides = [1, 1]} : vector<8x96xf32> to vector<8x32xf32>
    %383 = vector.extract_strided_slice %378 {offsets = [0, 64], sizes = [8, 32], strides = [1, 1]} : vector<8x96xf32> to vector<8x32xf32>
    %384 = arith.mulf %382, %339 : vector<8x32xf32>
    %385 = arith.mulf %381, %380 : vector<8x32xf32>
    %386 = arith.addf %384, %385 : vector<8x32xf32>
    %387 = math.tanh %386 : vector<8x32xf32>
    %388 = arith.mulf %383, %387 : vector<8x32xf32>
    %c48_109 = arith.constant 48 : index
    %c0_110 = arith.constant 0 : index
    %389 = vector.load %arg1[%c48_109, %c0_110] : memref<64x32xf32, #tpu.memory_space<vmem>>, vector<8x32xf32>
    %390 = arith.mulf %389, %388 : vector<8x32xf32>
    %c6_111 = arith.constant 6 : index
    %c0_112 = arith.constant 0 : index
    %c0_113 = arith.constant 0 : index
    %391 = vector.load %arg6[%c6_111, %c0_112, %c0_113] : memref<8x8x64xf32, #tpu.memory_space<vmem>>, vector<1x8x32xf32>
    %392 = vector.shape_cast %391 : vector<1x8x32xf32> to vector<8x32xf32>
    %393 = vector.shape_cast %390 : vector<8x32xf32> to vector<1x8x32xf32>
    tpu.vector_store %arg6[%c6_111, %c0_112, %c0_113], %393 {strides = array<i32>} : memref<8x8x64xf32, #tpu.memory_space<vmem>>, vector<1x8x32xf32>,
    %394 = arith.subf %388, %336 : vector<8x32xf32>
    %395 = arith.mulf %389, %394 : vector<8x32xf32>
    %396 = arith.addf %336, %395 : vector<8x32xf32>
    %397 = arith.subf %386, %339 : vector<8x32xf32>
    %398 = arith.mulf %389, %397 : vector<8x32xf32>
    %399 = arith.addf %339, %398 : vector<8x32xf32>
    %c8_114 = arith.constant 8 : index
    %c128_115 = arith.constant 128 : index
    %400 = vector.load %arg9[%c8_114, %c128_115] : memref<64x256xf32, #tpu.memory_space<vmem>>, vector<8x128xf32>
    %cst_116 = arith.constant dense<0.000000e+00> : vector<8x128xf32>
    %401 = tpu.matmul %366, %8, %cst_116 {dimension_numbers = #tpu.dot_dimension_numbers<[1], [0], [0], [1], [0, 0, 1, 1], [], []>} : vector<8x32xf32>, vector<32x128xf32>, vector<8x128xf32> -> vector<8x128xf32>
    %402 = arith.addf %400, %401 : vector<8x128xf32>
    %403 = vector.extract_strided_slice %402 {offsets = [0, 0], sizes = [8, 96], strides = [1, 1]} : vector<8x128xf32> to vector<8x96xf32>
    %404 = arith.negf %403 : vector<8x96xf32>
    %405 = math.exp %404 : vector<8x96xf32>
    %cst_117 = arith.constant 1.000000e+00 : f32
    %406 = vector.broadcast %cst_117 : f32 to vector<8x96xf32>
    %407 = arith.addf %406, %405 : vector<8x96xf32>
    %408 = arith.divf %406, %407 : vector<8x96xf32>
    %409 = vector.extract_strided_slice %402 {offsets = [0, 96], sizes = [8, 32], strides = [1, 1]} : vector<8x128xf32> to vector<8x32xf32>
    %410 = math.tanh %409 : vector<8x32xf32>
    %411 = vector.extract_strided_slice %408 {offsets = [0, 0], sizes = [8, 32], strides = [1, 1]} : vector<8x96xf32> to vector<8x32xf32>
    %412 = vector.extract_strided_slice %408 {offsets = [0, 32], sizes = [8, 32], strides = [1, 1]} : vector<8x96xf32> to vector<8x32xf32>
    %413 = vector.extract_strided_slice %408 {offsets = [0, 64], sizes = [8, 32], strides = [1, 1]} : vector<8x96xf32> to vector<8x32xf32>
    %414 = arith.mulf %412, %369 : vector<8x32xf32>
    %415 = arith.mulf %411, %410 : vector<8x32xf32>
    %416 = arith.addf %414, %415 : vector<8x32xf32>
    %417 = math.tanh %416 : vector<8x32xf32>
    %418 = arith.mulf %413, %417 : vector<8x32xf32>
    %c8_118 = arith.constant 8 : index
    %c0_119 = arith.constant 0 : index
    %419 = vector.load %arg1[%c8_118, %c0_119] : memref<64x32xf32, #tpu.memory_space<vmem>>, vector<8x32xf32>
    %420 = arith.mulf %419, %418 : vector<8x32xf32>
    %c1_120 = arith.constant 1 : index
    %c0_121 = arith.constant 0 : index
    %c32_122 = arith.constant 32 : index
    %421 = vector.load %arg6[%c1_120, %c0_121, %c32_122] : memref<8x8x64xf32, #tpu.memory_space<vmem>>, vector<1x8x32xf32>
    %422 = vector.shape_cast %421 : vector<1x8x32xf32> to vector<8x32xf32>
    %423 = vector.shape_cast %420 : vector<8x32xf32> to vector<1x8x32xf32>
    tpu.vector_store %arg6[%c1_120, %c0_121, %c32_122], %423 {strides = array<i32>} : memref<8x8x64xf32, #tpu.memory_space<vmem>>, vector<1x8x32xf32>,
    %424 = arith.subf %418, %366 : vector<8x32xf32>
    %425 = arith.mulf %419, %424 : vector<8x32xf32>
    %426 = arith.addf %366, %425 : vector<8x32xf32>
    %427 = arith.subf %416, %369 : vector<8x32xf32>
    %428 = arith.mulf %419, %427 : vector<8x32xf32>
    %429 = arith.addf %369, %428 : vector<8x32xf32>
    %c56_123 = arith.constant 56 : index
    %c0_124 = arith.constant 0 : index
    %430 = vector.load %arg9[%c56_123, %c0_124] : memref<64x256xf32, #tpu.memory_space<vmem>>, vector<8x128xf32>
    %cst_125 = arith.constant dense<0.000000e+00> : vector<8x128xf32>
    %431 = tpu.matmul %396, %7, %cst_125 {dimension_numbers = #tpu.dot_dimension_numbers<[1], [0], [0], [1], [0, 0, 1, 1], [], []>} : vector<8x32xf32>, vector<32x128xf32>, vector<8x128xf32> -> vector<8x128xf32>
    %432 = arith.addf %430, %431 : vector<8x128xf32>
    %433 = vector.extract_strided_slice %432 {offsets = [0, 0], sizes = [8, 96], strides = [1, 1]} : vector<8x128xf32> to vector<8x96xf32>
    %434 = arith.negf %433 : vector<8x96xf32>
    %435 = math.exp %434 : vector<8x96xf32>
    %cst_126 = arith.constant 1.000000e+00 : f32
    %436 = vector.broadcast %cst_126 : f32 to vector<8x96xf32>
    %437 = arith.addf %436, %435 : vector<8x96xf32>
    %438 = arith.divf %436, %437 : vector<8x96xf32>
    %439 = vector.extract_strided_slice %432 {offsets = [0, 96], sizes = [8, 32], strides = [1, 1]} : vector<8x128xf32> to vector<8x32xf32>
    %440 = math.tanh %439 : vector<8x32xf32>
    %441 = vector.extract_strided_slice %438 {offsets = [0, 0], sizes = [8, 32], strides = [1, 1]} : vector<8x96xf32> to vector<8x32xf32>
    %442 = vector.extract_strided_slice %438 {offsets = [0, 32], sizes = [8, 32], strides = [1, 1]} : vector<8x96xf32> to vector<8x32xf32>
    %443 = vector.extract_strided_slice %438 {offsets = [0, 64], sizes = [8, 32], strides = [1, 1]} : vector<8x96xf32> to vector<8x32xf32>
    %444 = arith.mulf %442, %399 : vector<8x32xf32>
    %445 = arith.mulf %441, %440 : vector<8x32xf32>
    %446 = arith.addf %444, %445 : vector<8x32xf32>
    %447 = math.tanh %446 : vector<8x32xf32>
    %448 = arith.mulf %443, %447 : vector<8x32xf32>
    %c56_127 = arith.constant 56 : index
    %c0_128 = arith.constant 0 : index
    %449 = vector.load %arg1[%c56_127, %c0_128] : memref<64x32xf32, #tpu.memory_space<vmem>>, vector<8x32xf32>
    %450 = arith.mulf %449, %448 : vector<8x32xf32>
    %c7_129 = arith.constant 7 : index
    %c0_130 = arith.constant 0 : index
    %c0_131 = arith.constant 0 : index
    %451 = vector.load %arg6[%c7_129, %c0_130, %c0_131] : memref<8x8x64xf32, #tpu.memory_space<vmem>>, vector<1x8x32xf32>
    %452 = vector.shape_cast %451 : vector<1x8x32xf32> to vector<8x32xf32>
    %453 = vector.shape_cast %450 : vector<8x32xf32> to vector<1x8x32xf32>
    tpu.vector_store %arg6[%c7_129, %c0_130, %c0_131], %453 {strides = array<i32>} : memref<8x8x64xf32, #tpu.memory_space<vmem>>, vector<1x8x32xf32>,
    %454 = arith.subf %448, %396 : vector<8x32xf32>
    %455 = arith.mulf %449, %454 : vector<8x32xf32>
    %456 = arith.addf %396, %455 : vector<8x32xf32>
    %457 = arith.subf %446, %399 : vector<8x32xf32>
    %458 = arith.mulf %449, %457 : vector<8x32xf32>
    %459 = arith.addf %399, %458 : vector<8x32xf32>
    %c0_132 = arith.constant 0 : index
    %c128_133 = arith.constant 128 : index
    %460 = vector.load %arg9[%c0_132, %c128_133] : memref<64x256xf32, #tpu.memory_space<vmem>>, vector<8x128xf32>
    %cst_134 = arith.constant dense<0.000000e+00> : vector<8x128xf32>
    %461 = tpu.matmul %426, %8, %cst_134 {dimension_numbers = #tpu.dot_dimension_numbers<[1], [0], [0], [1], [0, 0, 1, 1], [], []>} : vector<8x32xf32>, vector<32x128xf32>, vector<8x128xf32> -> vector<8x128xf32>
    %462 = arith.addf %460, %461 : vector<8x128xf32>
    %463 = vector.extract_strided_slice %462 {offsets = [0, 0], sizes = [8, 96], strides = [1, 1]} : vector<8x128xf32> to vector<8x96xf32>
    %464 = arith.negf %463 : vector<8x96xf32>
    %465 = math.exp %464 : vector<8x96xf32>
    %cst_135 = arith.constant 1.000000e+00 : f32
    %466 = vector.broadcast %cst_135 : f32 to vector<8x96xf32>
    %467 = arith.addf %466, %465 : vector<8x96xf32>
    %468 = arith.divf %466, %467 : vector<8x96xf32>
    %469 = vector.extract_strided_slice %462 {offsets = [0, 96], sizes = [8, 32], strides = [1, 1]} : vector<8x128xf32> to vector<8x32xf32>
    %470 = math.tanh %469 : vector<8x32xf32>
    %471 = vector.extract_strided_slice %468 {offsets = [0, 0], sizes = [8, 32], strides = [1, 1]} : vector<8x96xf32> to vector<8x32xf32>
    %472 = vector.extract_strided_slice %468 {offsets = [0, 32], sizes = [8, 32], strides = [1, 1]} : vector<8x96xf32> to vector<8x32xf32>
    %473 = vector.extract_strided_slice %468 {offsets = [0, 64], sizes = [8, 32], strides = [1, 1]} : vector<8x96xf32> to vector<8x32xf32>
    %474 = arith.mulf %472, %429 : vector<8x32xf32>
    %475 = arith.mulf %471, %470 : vector<8x32xf32>
    %476 = arith.addf %474, %475 : vector<8x32xf32>
    %477 = math.tanh %476 : vector<8x32xf32>
    %478 = arith.mulf %473, %477 : vector<8x32xf32>
    %c0_136 = arith.constant 0 : index
    %c0_137 = arith.constant 0 : index
    %479 = vector.load %arg1[%c0_136, %c0_137] : memref<64x32xf32, #tpu.memory_space<vmem>>, vector<8x32xf32>
    %480 = arith.mulf %479, %478 : vector<8x32xf32>
    %c0_138 = arith.constant 0 : index
    %c0_139 = arith.constant 0 : index
    %c32_140 = arith.constant 32 : index
    %481 = vector.load %arg6[%c0_138, %c0_139, %c32_140] : memref<8x8x64xf32, #tpu.memory_space<vmem>>, vector<1x8x32xf32>
    %482 = vector.shape_cast %481 : vector<1x8x32xf32> to vector<8x32xf32>
    %483 = vector.shape_cast %480 : vector<8x32xf32> to vector<1x8x32xf32>
    tpu.vector_store %arg6[%c0_138, %c0_139, %c32_140], %483 {strides = array<i32>} : memref<8x8x64xf32, #tpu.memory_space<vmem>>, vector<1x8x32xf32>,
    %484 = arith.subf %478, %426 : vector<8x32xf32>
    %485 = arith.mulf %479, %484 : vector<8x32xf32>
    %486 = arith.addf %426, %485 : vector<8x32xf32>
    %487 = arith.subf %476, %429 : vector<8x32xf32>
    %488 = arith.mulf %479, %487 : vector<8x32xf32>
    %489 = arith.addf %429, %488 : vector<8x32xf32>
    %c0_141 = arith.constant 0 : index
    %c0_142 = arith.constant 0 : index
    %c0_143 = arith.constant 0 : index
    %490 = vector.load %arg7[%c0_141, %c0_142, %c0_143] : memref<2x8x32xf32, #tpu.memory_space<vmem>>, vector<1x8x32xf32>
    %491 = vector.shape_cast %490 : vector<1x8x32xf32> to vector<8x32xf32>
    %492 = vector.shape_cast %456 : vector<8x32xf32> to vector<1x8x32xf32>
    tpu.vector_store %arg7[%c0_141, %c0_142, %c0_143], %492 {strides = array<i32>} : memref<2x8x32xf32, #tpu.memory_space<vmem>>, vector<1x8x32xf32>,
    %c1_144 = arith.constant 1 : index
    %c0_145 = arith.constant 0 : index
    %c0_146 = arith.constant 0 : index
    %493 = vector.load %arg7[%c1_144, %c0_145, %c0_146] : memref<2x8x32xf32, #tpu.memory_space<vmem>>, vector<1x8x32xf32>
    %494 = vector.shape_cast %493 : vector<1x8x32xf32> to vector<8x32xf32>
    %495 = vector.shape_cast %486 : vector<8x32xf32> to vector<1x8x32xf32>
    tpu.vector_store %arg7[%c1_144, %c0_145, %c0_146], %495 {strides = array<i32>} : memref<2x8x32xf32, #tpu.memory_space<vmem>>, vector<1x8x32xf32>,
    %c0_147 = arith.constant 0 : index
    %c0_148 = arith.constant 0 : index
    %c0_149 = arith.constant 0 : index
    %496 = vector.load %arg8[%c0_147, %c0_148, %c0_149] : memref<2x8x32xf32, #tpu.memory_space<vmem>>, vector<1x8x32xf32>
    %497 = vector.shape_cast %496 : vector<1x8x32xf32> to vector<8x32xf32>
    %498 = vector.shape_cast %459 : vector<8x32xf32> to vector<1x8x32xf32>
    tpu.vector_store %arg8[%c0_147, %c0_148, %c0_149], %498 {strides = array<i32>} : memref<2x8x32xf32, #tpu.memory_space<vmem>>, vector<1x8x32xf32>,
    %c1_150 = arith.constant 1 : index
    %c0_151 = arith.constant 0 : index
    %c0_152 = arith.constant 0 : index
    %499 = vector.load %arg8[%c1_150, %c0_151, %c0_152] : memref<2x8x32xf32, #tpu.memory_space<vmem>>, vector<1x8x32xf32>
    %500 = vector.shape_cast %499 : vector<1x8x32xf32> to vector<8x32xf32>
    %501 = vector.shape_cast %489 : vector<8x32xf32> to vector<1x8x32xf32>
    tpu.vector_store %arg8[%c1_150, %c0_151, %c0_152], %501 {strides = array<i32>} : memref<2x8x32xf32, #tpu.memory_space<vmem>>, vector<1x8x32xf32>,
    return
  }
}

</mosaic_0001>

<llo_original>
// kernel: tpu_custom_call.1
$region0: #{tpu_custom_call.1}
  #allocation0 [shape = 'u32[]', space=smem, size = 0x4, offset = 0x4, fixed_abs, tag = 'smem constant byte address 0x4 - core index']
  #allocation1 [shape = 'u32[72,128]{1,0:T(1,128)}', space=vmem, size = 0x9000, scoped, tag = 'internal scratch']
  #allocation2 [shape = 'f32[64,256]{1,0:T(8,128)}', space=vmem, size = 0x10000, scoped, tag = 'scratch operand']
  %s0 = inlined_call_operand.vmem [shape: f32[64,16], index: 0, kind: input, shape index: {}]
  %s1 = inlined_call_operand.vmem [shape: f32[64,32], index: 1, kind: input, shape index: {}]
  %s2 = inlined_call_operand.vmem [shape: f32[16,256], index: 2, kind: input, shape index: {}]
  %s3 = inlined_call_operand.vmem [shape: f32[1,256], index: 3, kind: input, shape index: {}]
  %s4 = inlined_call_operand.vmem [shape: f32[32,128], index: 4, kind: input, shape index: {}]
  %s5 = inlined_call_operand.vmem [shape: f32[32,128], index: 5, kind: input, shape index: {}]
  %s6 = inlined_call_operand.hbm [shape: f32[8,8,64], index: 6, kind: output, shape index: {0}]
  %s7 = inlined_call_operand.hbm [shape: f32[2,8,32], index: 7, kind: output, shape index: {1}]
  %s8 = inlined_call_operand.hbm [shape: f32[2,8,32], index: 8, kind: output, shape index: {2}]
  %9 = xla_tuple %s6, %s7, %s8
  %s10 = sld [smem:[#allocation0]]
  $region50: #{tpu_custom_call.1} parent=0
    _
  %s12 = ssub.s32 1, %s10
  %s13 = scalar_select 0, %s12, %s10
  $region1: #{tpu_custom_call.1} parent=0
    #allocation3 [shape = 'u8[32768]{0}', space=vmem, size = 0x8000, scoped, tag = 'output window, operand 0, single buffered']
    #allocation4 [shape = 's32[1]{0}', space=sflag, size = 0x4, scoped, tag = 'scoped memory for tpu_custom_call.1']
    #allocation5 [shape = 'u8[8192]{0}', space=vmem, size = 0x2000, scoped, tag = 'output window, operand 1, single buffered']
    #allocation6 [shape = 's32[1]{0}', space=sflag, size = 0x4, scoped, tag = 'scoped memory for tpu_custom_call.1']
    #allocation7 [shape = 'u8[8192]{0}', space=vmem, size = 0x2000, scoped, tag = 'output window, operand 2, single buffered']
    %14 = vsyncpa [#allocation4], 0
    %15 = vsyncpa [#allocation6], 0
    // Predicated region
    $region2: #{tpu_custom_call.1} parent=1 // pred_check
      _
    $region3: #{tpu_custom_call.1} parent=1 // pred_check_branch
      %17 = sbr.rel (0) target = $region5
    $region4: #{tpu_custom_call.1} parent=1 // pred_region
      _
    $region5: #{tpu_custom_call.1} parent=1 // pred_fallthru
      _
    // Predicated region
    $region6: #{tpu_custom_call.1} parent=1 // pred_check
      _
    $region7: #{tpu_custom_call.1} parent=1 // pred_check_branch
      %19 = sbr.rel (0) target = $region9
    $region8: #{tpu_custom_call.1} parent=1 // pred_region
      _
    $region9: #{tpu_custom_call.1} parent=1 // pred_fallthru
      _
    // Predicated region
    $region10: #{tpu_custom_call.1} parent=1 // pred_check
      _
    $region11: #{tpu_custom_call.1} parent=1 // pred_check_branch
      %21 = sbr.rel (0) target = $region13
    $region12: #{tpu_custom_call.1} parent=1 // pred_region
      _
    $region13: #{tpu_custom_call.1} parent=1 // pred_fallthru
      _
    // Predicated region
    $region14: #{tpu_custom_call.1} parent=1 // pred_check
      _
    $region15: #{tpu_custom_call.1} parent=1 // pred_check_branch
      %23 = sbr.rel (0) target = $region17
    $region16: #{tpu_custom_call.1} parent=1 // pred_region
      _
    $region17: #{tpu_custom_call.1} parent=1 // pred_fallthru
      _
    // Predicated region
    $region18: #{tpu_custom_call.1} parent=1 // pred_check
      _
    $region19: #{tpu_custom_call.1} parent=1 // pred_check_branch
      %25 = sbr.rel (0) target = $region21
    $region20: #{tpu_custom_call.1} parent=1 // pred_region
      _
    $region21: #{tpu_custom_call.1} parent=1 // pred_fallthru
      _
    // Predicated region
    $region22: #{tpu_custom_call.1} parent=1 // pred_check
      _
    $region23: #{tpu_custom_call.1} parent=1 // pred_check_branch
      %27 = sbr.rel (0) target = $region25
    $region24: #{tpu_custom_call.1} parent=1 // pred_region
      _
    $region25: #{tpu_custom_call.1} parent=1 // pred_fallthru
      _
    %v28 = vld [vmem:[%s0] sm:$0xff]
    %v29 = vld [vmem:[%s0 + $0x8] sm:$0xff]
    %v30 = vld [vmem:[%s0 + $0x10] sm:$0xff]
    %v31 = vld [vmem:[%s0 + $0x18] sm:$0xff]
    %v32 = vld [vmem:[%s0 + $0x20] sm:$0xff]
    %v33 = vld [vmem:[%s0 + $0x28] sm:$0xff]
    %v34 = vld [vmem:[%s0 + $0x30] sm:$0xff]
    %v35 = vld [vmem:[%s0 + $0x38] sm:$0xff]
    %v36 = vld [vmem:[%s2] sm:$0xff]
    %v37 = vld [vmem:[%s2 + $0x8] sm:$0xff]
    %v38 = vld [vmem:[%s2 + $0x10] sm:$0xff]
    %v39 = vld [vmem:[%s2 + $0x18] sm:$0xff]
    %v40 = vld [vmem:[%s3] sm:$0x3]
    %v42 = vperm.slane %v40, 0
    %v43 = vperm.slane %v40, 1
    %vm46 = vcmask 130048
    %v48 = vsel %vm46, %v28, 0
    %v51 = vsel %vm46, %v29, 0
    %v54 = vsel %vm46, %v30, 0
    %v57 = vsel %vm46, %v31, 0
    %v60 = vsel %vm46, %v32, 0
    %v63 = vsel %vm46, %v33, 0
    %v66 = vsel %vm46, %v34, 0
    %v69 = vsel %vm46, %v35, 0
    %71 = vmatpush.msra.mxu0 0.0
    %72 = vmatpush.msra.mxu0 0.0
    %73 = vmatpush.msra.mxu0 0.0
    %74 = vmatpush.msra.mxu0 0.0
    %75 = vmatpush.msra.mxu0 0.0
    %76 = vmatpush.msra.mxu0 0.0
    %77 = vmatpush.msra.mxu0 0.0
    %78 = vmatpush.msra.mxu0 0.0
    %79 = vmatpush.msra.mxu0 0.0
    %80 = vmatpush.msra.mxu0 0.0
    %81 = vmatpush.msra.mxu0 0.0
    %82 = vmatpush.msra.mxu0 0.0
    %83 = vmatpush.msra.mxu0 0.0
    %84 = vmatpush.msra.mxu0 0.0
    %85 = vmatpush.msra.mxu0 %v38
    %86 = vmatpush.msra.mxu0 %v36
    %87 = vmatmul.f32.gmra.mxu0 %v48
    %v88 = vpop.f32.mrf.mxu0
    %v89 = vadd.f32 %v42, %v88
    %90 = vmatmul.f32.gmra.mxu0 %v51
    %v91 = vpop.f32.mrf.mxu0
    %v92 = vadd.f32 %v42, %v91
    %93 = vmatmul.f32.gmra.mxu0 %v54
    %v94 = vpop.f32.mrf.mxu0
    %v95 = vadd.f32 %v42, %v94
    %96 = vmatmul.f32.gmra.mxu0 %v57
    %v97 = vpop.f32.mrf.mxu0
    %v98 = vadd.f32 %v42, %v97
    %99 = vmatmul.f32.gmra.mxu0 %v60
    %v100 = vpop.f32.mrf.mxu0
    %v101 = vadd.f32 %v42, %v100
    %102 = vmatmul.f32.gmra.mxu0 %v63
    %v103 = vpop.f32.mrf.mxu0
    %v104 = vadd.f32 %v42, %v103
    %105 = vmatmul.f32.gmra.mxu0 %v66
    %v106 = vpop.f32.mrf.mxu0
    %v107 = vadd.f32 %v42, %v106
    %108 = vmatmul.f32.gmra.mxu0 %v69
    %v109 = vpop.f32.mrf.mxu0
    %v110 = vadd.f32 %v42, %v109
    %111 = vdwg.mxu0
    %112 = vmatpush.msra.mxu0 0.0
    %113 = vmatpush.msra.mxu0 0.0
    %114 = vmatpush.msra.mxu0 0.0
    %115 = vmatpush.msra.mxu0 0.0
    %116 = vmatpush.msra.mxu0 0.0
    %117 = vmatpush.msra.mxu0 0.0
    %118 = vmatpush.msra.mxu0 0.0
    %119 = vmatpush.msra.mxu0 0.0
    %120 = vmatpush.msra.mxu0 0.0
    %121 = vmatpush.msra.mxu0 0.0
    %122 = vmatpush.msra.mxu0 0.0
    %123 = vmatpush.msra.mxu0 0.0
    %124 = vmatpush.msra.mxu0 0.0
    %125 = vmatpush.msra.mxu0 0.0
    %126 = vmatpush.msra.mxu0 %v39
    %127 = vmatpush.msra.mxu0 %v37
    %128 = vmatmul.f32.gmra.mxu0 %v48
    %v129 = vpop.f32.mrf.mxu0
    %v130 = vadd.f32 %v43, %v129
    %131 = vmatmul.f32.gmra.mxu0 %v51
    %v132 = vpop.f32.mrf.mxu0
    %v133 = vadd.f32 %v43, %v132
    %134 = vmatmul.f32.gmra.mxu0 %v54
    %v135 = vpop.f32.mrf.mxu0
    %v136 = vadd.f32 %v43, %v135
    %137 = vmatmul.f32.gmra.mxu0 %v57
    %v138 = vpop.f32.mrf.mxu0
    %v139 = vadd.f32 %v43, %v138
    %140 = vmatmul.f32.gmra.mxu0 %v60
    %v141 = vpop.f32.mrf.mxu0
    %v142 = vadd.f32 %v43, %v141
    %143 = vmatmul.f32.gmra.mxu0 %v63
    %v144 = vpop.f32.mrf.mxu0
    %v145 = vadd.f32 %v43, %v144
    %146 = vmatmul.f32.gmra.mxu0 %v66
    %v147 = vpop.f32.mrf.mxu0
    %v148 = vadd.f32 %v43, %v147
    %149 = vmatmul.f32.gmra.mxu0 %v69
    %v150 = vpop.f32.mrf.mxu0
    %v151 = vadd.f32 %v43, %v150
    %152 = vdwg.mxu0
    %153 = vst [vmem:[#allocation2] sm:$0xff] %v89
    %154 = vst [vmem:[#allocation2 + $0x8] sm:$0xff] %v130
    %155 = vst [vmem:[#allocation2 + $0x10] sm:$0xff] %v92
    %156 = vst [vmem:[#allocation2 + $0x18] sm:$0xff] %v133
    %157 = vst [vmem:[#allocation2 + $0x20] sm:$0xff] %v95
    %158 = vst [vmem:[#allocation2 + $0x28] sm:$0xff] %v136
    %159 = vst [vmem:[#allocation2 + $0x30] sm:$0xff] %v98
    %160 = vst [vmem:[#allocation2 + $0x38] sm:$0xff] %v139
    %161 = vst [vmem:[#allocation2 + $0x40] sm:$0xff] %v101
    %162 = vst [vmem:[#allocation2 + $0x48] sm:$0xff] %v142
    %163 = vst [vmem:[#allocation2 + $0x50] sm:$0xff] %v104
    %164 = vst [vmem:[#allocation2 + $0x58] sm:$0xff] %v145
    %165 = vst [vmem:[#allocation2 + $0x60] sm:$0xff] %v107
    %166 = vst [vmem:[#allocation2 + $0x68] sm:$0xff] %v148
    %167 = vst [vmem:[#allocation2 + $0x70] sm:$0xff] %v110
    %168 = vst [vmem:[#allocation2 + $0x78] sm:$0xff] %v151
    %v169 = vld [vmem:[%s4] sm:$0xff]
    %v170 = vld [vmem:[%s4 + $0x8] sm:$0xff]
    %v171 = vld [vmem:[%s4 + $0x10] sm:$0xff]
    %v172 = vld [vmem:[%s4 + $0x18] sm:$0xff]
    %v173 = vld [vmem:[%s5] sm:$0xff]
    %v174 = vld [vmem:[%s5 + $0x8] sm:$0xff]
    %v175 = vld [vmem:[%s5 + $0x10] sm:$0xff]
    %v176 = vld [vmem:[%s5 + $0x18] sm:$0xff]
    %v177 = vld [vmem:[#allocation2] sm:$0xff]
    %vm178 = vcmask 261120
    %v180 = vsel %vm178, 0.0, 0
    %182 = vmatpush.msra.mxu0 0.0
    %183 = vmatpush.msra.mxu0 0.0
    %184 = vmatpush.msra.mxu0 0.0
    %185 = vmatpush.msra.mxu0 0.0
    %186 = vmatpush.msra.mxu0 0.0
    %187 = vmatpush.msra.mxu0 0.0
    %188 = vmatpush.msra.mxu0 0.0
    %189 = vmatpush.msra.mxu0 0.0
    %190 = vmatpush.msra.mxu0 0.0
    %191 = vmatpush.msra.mxu0 0.0
    %192 = vmatpush.msra.mxu0 0.0
    %193 = vmatpush.msra.mxu0 0.0
    %194 = vmatpush.msra.mxu0 %v172
    %195 = vmatpush.msra.mxu0 %v171
    %196 = vmatpush.msra.mxu0 %v170
    %197 = vmatpush.msra.mxu0 %v169
    %198 = vmatmul.f32.gmra.mxu0 %v180
    %v199 = vpop.f32.mrf.mxu0
    %v200 = vadd.f32 0.0, %v199
    %201 = vdwg.mxu0
    %v202 = vadd.f32 %v177, %v200
    %v203 = vxor.u32 %v202, 2147483648
    %v204 = vmul.f32 %v203, 1.442695
    %v205 = vpow.pop %v204
    %v206 = vadd.f32 %v205, 1.0
    %v207 = vrcp.pop %v206
    %v208 = vmul.f32 %v206, %v207
    %v209 = vsub.f32 1.0, %v208
    %v210 = vmul.f32 %v207, %v209
    %v211 = vadd.f32 %v207, %v210
    %vm212 = vweird.f32 %v206
    %vm213 = vweird.f32 %v207
    %vm214 = vmor %vm212, %vm213
    %v215 = vsel %vm214, %v207, %v211
    %v216 = vand.u32 2147483647, %v206
    %vm217 = vcmp.eq.f32.partialorder %v216, 8.507059e+37
    %v218 = vand.u32 %v206, 2147483648
    %v219 = vor.u32 1.1754944e-38, %v218
    %v220 = vsel %vm217, %v219, %v215
    %v221 = vmul.f32 1.0, %v220
    %v222 = vtanh.pop %v202
    %v223 = vmul.f32 %v221, 0.0
    %225 = vrot.lane.b32.xlu0 %v222, 32
    %v226 = vpop.permute.xlu0 %225
    %v228 = vmul.f32 %v221, %v226
    %230 = vrot.lane.b32.xlu0 %v228, 32
    %v231 = vpop.permute.xlu0 %230
    %v233 = vadd.f32 %v223, %v231
    %v234 = vtanh.pop %v233
    %236 = vrot.lane.b32.xlu0 %v234, 32
    %v237 = vpop.permute.xlu0 %236
    %v239 = vmul.f32 %v221, %v237
    %v240 = vld [vmem:[%s1] sm:$0xff]
    %242 = vrot.lane.b32.xlu0 %v239, 64
    %v243 = vpop.permute.xlu0 %242
    %v245 = vmul.f32 %v240, %v243
    %246 = vst.msk [vmem:[#allocation3] sm:$0xff] %vm178, %v245
    %v247 = vadd.f32 %v245, 0.0
    %249 = vrot.lane.b32.xlu0 %v233, 96
    %v250 = vpop.permute.xlu0 %249
    %v252 = vmul.f32 %v240, %v250
    %v253 = vadd.f32 %v252, 0.0
    %v254 = vld [vmem:[#allocation2 + $0x78] sm:$0xff]
    %255 = vmatpush.msra.mxu0 0.0
    %256 = vmatpush.msra.mxu0 0.0
    %257 = vmatpush.msra.mxu0 0.0
    %258 = vmatpush.msra.mxu0 0.0
    %259 = vmatpush.msra.mxu0 0.0
    %260 = vmatpush.msra.mxu0 0.0
    %261 = vmatpush.msra.mxu0 0.0
    %262 = vmatpush.msra.mxu0 0.0
    %263 = vmatpush.msra.mxu0 0.0
    %264 = vmatpush.msra.mxu0 0.0
    %265 = vmatpush.msra.mxu0 0.0
    %266 = vmatpush.msra.mxu0 0.0
    %267 = vmatpush.msra.mxu0 %v176
    %268 = vmatpush.msra.mxu0 %v175
    %269 = vmatpush.msra.mxu0 %v174
    %270 = vmatpush.msra.mxu0 %v173
    %271 = vmatmul.f32.gmra.mxu0 %v180
    %v272 = vpop.f32.mrf.mxu0
    %v273 = vadd.f32 0.0, %v272
    %274 = vdwg.mxu0
    %v275 = vadd.f32 %v254, %v273
    %v276 = vxor.u32 %v275, 2147483648
    %v277 = vmul.f32 %v276, 1.442695
    %v278 = vpow.pop %v277
    %v279 = vadd.f32 %v278, 1.0
    %v280 = vrcp.pop %v279
    %v281 = vmul.f32 %v279, %v280
    %v282 = vsub.f32 1.0, %v281
    %v283 = vmul.f32 %v280, %v282
    %v284 = vadd.f32 %v280, %v283
    %vm285 = vweird.f32 %v279
    %vm286 = vweird.f32 %v280
    %vm287 = vmor %vm285, %vm286
    %v288 = vsel %vm287, %v280, %v284
    %v289 = vand.u32 2147483647, %v279
    %vm290 = vcmp.eq.f32.partialorder %v289, 8.507059e+37
    %v291 = vand.u32 %v279, 2147483648
    %v292 = vor.u32 1.1754944e-38, %v291
    %v293 = vsel %vm290, %v292, %v288
    %v294 = vmul.f32 1.0, %v293
    %v295 = vtanh.pop %v275
    %v296 = vmul.f32 %v294, 0.0
    %298 = vrot.lane.b32.xlu0 %v295, 32
    %v299 = vpop.permute.xlu0 %298
    %v301 = vmul.f32 %v294, %v299
    %303 = vrot.lane.b32.xlu0 %v301, 32
    %v304 = vpop.permute.xlu0 %303
    %v306 = vadd.f32 %v296, %v304
    %v307 = vtanh.pop %v306
    %309 = vrot.lane.b32.xlu0 %v307, 32
    %v310 = vpop.permute.xlu0 %309
    %v312 = vmul.f32 %v294, %v310
    %v313 = vld [vmem:[%s1 + $0x38] sm:$0xff]
    %315 = vrot.lane.b32.xlu0 %v312, 64
    %v316 = vpop.permute.xlu0 %315
    %v318 = vmul.f32 %v313, %v316
    %320 = vrot.lane.b32.xlu0 %v318, 32
    %v321 = vpop.permute.xlu0 %320
    %s323 = scalar_lea.vmem [#allocation3], 56
    %vm324 = vcmask 523520
    %325 = vst.msk [vmem:[%s323] sm:$0xff] %vm324, %v321
    %v326 = vadd.f32 %v318, 0.0
    %328 = vrot.lane.b32.xlu0 %v306, 96
    %v329 = vpop.permute.xlu0 %328
    %v331 = vmul.f32 %v313, %v329
    %v332 = vadd.f32 %v331, 0.0
    %v333 = vld [vmem:[#allocation2 + $0x10] sm:$0xff]
    %v335 = vsel %vm178, %v247, 0
    %337 = vmatpush.msra.mxu0 0.0
    %338 = vmatpush.msra.mxu0 0.0
    %339 = vmatpush.msra.mxu0 0.0
    %340 = vmatpush.msra.mxu0 0.0
    %341 = vmatpush.msra.mxu0 0.0
    %342 = vmatpush.msra.mxu0 0.0
    %343 = vmatpush.msra.mxu0 0.0
    %344 = vmatpush.msra.mxu0 0.0
    %345 = vmatpush.msra.mxu0 0.0
    %346 = vmatpush.msra.mxu0 0.0
    %347 = vmatpush.msra.mxu0 0.0
    %348 = vmatpush.msra.mxu0 0.0
    %349 = vmatpush.msra.mxu0 %v172
    %350 = vmatpush.msra.mxu0 %v171
    %351 = vmatpush.msra.mxu0 %v170
    %352 = vmatpush.msra.mxu0 %v169
    %353 = vmatmul.f32.gmra.mxu0 %v335
    %v354 = vpop.f32.mrf.mxu0
    %v355 = vadd.f32 0.0, %v354
    %356 = vdwg.mxu0
    %v357 = vadd.f32 %v333, %v355
    %v358 = vxor.u32 %v357, 2147483648
    %v359 = vmul.f32 %v358, 1.442695
    %v360 = vpow.pop %v359
    %v361 = vadd.f32 %v360, 1.0
    %v362 = vrcp.pop %v361
    %v363 = vmul.f32 %v361, %v362
    %v364 = vsub.f32 1.0, %v363
    %v365 = vmul.f32 %v362, %v364
    %v366 = vadd.f32 %v362, %v365
    %vm367 = vweird.f32 %v361
    %vm368 = vweird.f32 %v362
    %vm369 = vmor %vm367, %vm368
    %v370 = vsel %vm369, %v362, %v366
    %v371 = vand.u32 2147483647, %v361
    %vm372 = vcmp.eq.f32.partialorder %v371, 8.507059e+37
    %v373 = vand.u32 %v361, 2147483648
    %v374 = vor.u32 1.1754944e-38, %v373
    %v375 = vsel %vm372, %v374, %v370
    %v376 = vmul.f32 1.0, %v375
    %v377 = vtanh.pop %v357
    %379 = vrot.lane.b32.xlu0 %v253, 32
    %v380 = vpop.permute.xlu0 %379
    %v382 = vmul.f32 %v376, %v380
    %384 = vrot.lane.b32.xlu0 %v377, 32
    %v385 = vpop.permute.xlu0 %384
    %v387 = vmul.f32 %v376, %v385
    %389 = vrot.lane.b32.xlu0 %v387, 32
    %v390 = vpop.permute.xlu0 %389
    %v392 = vadd.f32 %v382, %v390
    %v393 = vtanh.pop %v392
    %395 = vrot.lane.b32.xlu0 %v393, 32
    %v396 = vpop.permute.xlu0 %395
    %v398 = vmul.f32 %v376, %v396
    %v399 = vld [vmem:[%s1 + $0x8] sm:$0xff]
    %401 = vrot.lane.b32.xlu0 %v398, 64
    %v402 = vpop.permute.xlu0 %401
    %v404 = vmul.f32 %v399, %v402
    %s405 = scalar_lea.vmem [#allocation3], 8
    %406 = vst.msk [vmem:[%s405] sm:$0xff] %vm178, %v404
    %407 = vrot.lane.b32.xlu0 %v247, 64
    %v408 = vpop.permute.xlu0 %407
    %v410 = vsub.f32 %v398, %v408
    %412 = vrot.lane.b32.xlu0 %v410, 64
    %v413 = vpop.permute.xlu0 %412
    %v415 = vmul.f32 %v399, %v413
    %v416 = vadd.f32 %v247, %v415
    %v417 = vsub.f32 %v392, %v380
    %419 = vrot.lane.b32.xlu0 %v417, 96
    %v420 = vpop.permute.xlu0 %419
    %v422 = vmul.f32 %v399, %v420
    %v423 = vadd.f32 %v253, %v422
    %v424 = vld [vmem:[#allocation2 + $0x68] sm:$0xff]
    %v426 = vsel %vm178, %v326, 0
    %428 = vmatpush.msra.mxu0 0.0
    %429 = vmatpush.msra.mxu0 0.0
    %430 = vmatpush.msra.mxu0 0.0
    %431 = vmatpush.msra.mxu0 0.0
    %432 = vmatpush.msra.mxu0 0.0
    %433 = vmatpush.msra.mxu0 0.0
    %434 = vmatpush.msra.mxu0 0.0
    %435 = vmatpush.msra.mxu0 0.0
    %436 = vmatpush.msra.mxu0 0.0
    %437 = vmatpush.msra.mxu0 0.0
    %438 = vmatpush.msra.mxu0 0.0
    %439 = vmatpush.msra.mxu0 0.0
    %440 = vmatpush.msra.mxu0 %v176
    %441 = vmatpush.msra.mxu0 %v175
    %442 = vmatpush.msra.mxu0 %v174
    %443 = vmatpush.msra.mxu0 %v173
    %444 = vmatmul.f32.gmra.mxu0 %v426
    %v445 = vpop.f32.mrf.mxu0
    %v446 = vadd.f32 0.0, %v445
    %447 = vdwg.mxu0
    %v448 = vadd.f32 %v424, %v446
    %v449 = vxor.u32 %v448, 2147483648
    %v450 = vmul.f32 %v449, 1.442695
    %v451 = vpow.pop %v450
    %v452 = vadd.f32 %v451, 1.0
    %v453 = vrcp.pop %v452
    %v454 = vmul.f32 %v452, %v453
    %v455 = vsub.f32 1.0, %v454
    %v456 = vmul.f32 %v453, %v455
    %v457 = vadd.f32 %v453, %v456
    %vm458 = vweird.f32 %v452
    %vm459 = vweird.f32 %v453
    %vm460 = vmor %vm458, %vm459
    %v461 = vsel %vm460, %v453, %v457
    %v462 = vand.u32 2147483647, %v452
    %vm463 = vcmp.eq.f32.partialorder %v462, 8.507059e+37
    %v464 = vand.u32 %v452, 2147483648
    %v465 = vor.u32 1.1754944e-38, %v464
    %v466 = vsel %vm463, %v465, %v461
    %v467 = vmul.f32 1.0, %v466
    %v468 = vtanh.pop %v448
    %470 = vrot.lane.b32.xlu0 %v332, 32
    %v471 = vpop.permute.xlu0 %470
    %v473 = vmul.f32 %v467, %v471
    %475 = vrot.lane.b32.xlu0 %v468, 32
    %v476 = vpop.permute.xlu0 %475
    %v478 = vmul.f32 %v467, %v476
    %480 = vrot.lane.b32.xlu0 %v478, 32
    %v481 = vpop.permute.xlu0 %480
    %v483 = vadd.f32 %v473, %v481
    %v484 = vtanh.pop %v483
    %486 = vrot.lane.b32.xlu0 %v484, 32
    %v487 = vpop.permute.xlu0 %486
    %v489 = vmul.f32 %v467, %v487
    %v490 = vld [vmem:[%s1 + $0x30] sm:$0xff]
    %492 = vrot.lane.b32.xlu0 %v489, 64
    %v493 = vpop.permute.xlu0 %492
    %v495 = vmul.f32 %v490, %v493
    %497 = vrot.lane.b32.xlu0 %v495, 32
    %v498 = vpop.permute.xlu0 %497
    %s500 = scalar_lea.vmem [#allocation3], 48
    %501 = vst.msk [vmem:[%s500] sm:$0xff] %vm324, %v498
    %502 = vrot.lane.b32.xlu0 %v326, 64
    %v503 = vpop.permute.xlu0 %502
    %v505 = vsub.f32 %v489, %v503
    %507 = vrot.lane.b32.xlu0 %v505, 64
    %v508 = vpop.permute.xlu0 %507
    %v510 = vmul.f32 %v490, %v508
    %v511 = vadd.f32 %v326, %v510
    %v512 = vsub.f32 %v483, %v471
    %514 = vrot.lane.b32.xlu0 %v512, 96
    %v515 = vpop.permute.xlu0 %514
    %v517 = vmul.f32 %v490, %v515
    %v518 = vadd.f32 %v332, %v517
    %v519 = vld [vmem:[#allocation2 + $0x20] sm:$0xff]
    %v521 = vsel %vm178, %v416, 0
    %523 = vmatpush.msra.mxu0 0.0
    %524 = vmatpush.msra.mxu0 0.0
    %525 = vmatpush.msra.mxu0 0.0
    %526 = vmatpush.msra.mxu0 0.0
    %527 = vmatpush.msra.mxu0 0.0
    %528 = vmatpush.msra.mxu0 0.0
    %529 = vmatpush.msra.mxu0 0.0
    %530 = vmatpush.msra.mxu0 0.0
    %531 = vmatpush.msra.mxu0 0.0
    %532 = vmatpush.msra.mxu0 0.0
    %533 = vmatpush.msra.mxu0 0.0
    %534 = vmatpush.msra.mxu0 0.0
    %535 = vmatpush.msra.mxu0 %v172
    %536 = vmatpush.msra.mxu0 %v171
    %537 = vmatpush.msra.mxu0 %v170
    %538 = vmatpush.msra.mxu0 %v169
    %539 = vmatmul.f32.gmra.mxu0 %v521
    %v540 = vpop.f32.mrf.mxu0
    %v541 = vadd.f32 0.0, %v540
    %542 = vdwg.mxu0
    %v543 = vadd.f32 %v519, %v541
    %v544 = vxor.u32 %v543, 2147483648
    %v545 = vmul.f32 %v544, 1.442695
    %v546 = vpow.pop %v545
    %v547 = vadd.f32 %v546, 1.0
    %v548 = vrcp.pop %v547
    %v549 = vmul.f32 %v547, %v548
    %v550 = vsub.f32 1.0, %v549
    %v551 = vmul.f32 %v548, %v550
    %v552 = vadd.f32 %v548, %v551
    %vm553 = vweird.f32 %v547
    %vm554 = vweird.f32 %v548
    %vm555 = vmor %vm553, %vm554
    %v556 = vsel %vm555, %v548, %v552
    %v557 = vand.u32 2147483647, %v547
    %vm558 = vcmp.eq.f32.partialorder %v557, 8.507059e+37
    %v559 = vand.u32 %v547, 2147483648
    %v560 = vor.u32 1.1754944e-38, %v559
    %v561 = vsel %vm558, %v560, %v556
    %v562 = vmul.f32 1.0, %v561
    %v563 = vtanh.pop %v543
    %565 = vrot.lane.b32.xlu0 %v423, 32
    %v566 = vpop.permute.xlu0 %565
    %v568 = vmul.f32 %v562, %v566
    %570 = vrot.lane.b32.xlu0 %v563, 32
    %v571 = vpop.permute.xlu0 %570
    %v573 = vmul.f32 %v562, %v571
    %575 = vrot.lane.b32.xlu0 %v573, 32
    %v576 = vpop.permute.xlu0 %575
    %v578 = vadd.f32 %v568, %v576
    %v579 = vtanh.pop %v578
    %581 = vrot.lane.b32.xlu0 %v579, 32
    %v582 = vpop.permute.xlu0 %581
    %v584 = vmul.f32 %v562, %v582
    %v585 = vld [vmem:[%s1 + $0x10] sm:$0xff]
    %587 = vrot.lane.b32.xlu0 %v584, 64
    %v588 = vpop.permute.xlu0 %587
    %v590 = vmul.f32 %v585, %v588
    %s591 = scalar_lea.vmem [#allocation3], 16
    %592 = vst.msk [vmem:[%s591] sm:$0xff] %vm178, %v590
    %593 = vrot.lane.b32.xlu0 %v416, 64
    %v594 = vpop.permute.xlu0 %593
    %v596 = vsub.f32 %v584, %v594
    %598 = vrot.lane.b32.xlu0 %v596, 64
    %v599 = vpop.permute.xlu0 %598
    %v601 = vmul.f32 %v585, %v599
    %v602 = vadd.f32 %v416, %v601
    %v603 = vsub.f32 %v578, %v566
    %605 = vrot.lane.b32.xlu0 %v603, 96
    %v606 = vpop.permute.xlu0 %605
    %v608 = vmul.f32 %v585, %v606
    %v609 = vadd.f32 %v423, %v608
    %v610 = vld [vmem:[#allocation2 + $0x58] sm:$0xff]
    %v612 = vsel %vm178, %v511, 0
    %614 = vmatpush.msra.mxu0 0.0
    %615 = vmatpush.msra.mxu0 0.0
    %616 = vmatpush.msra.mxu0 0.0
    %617 = vmatpush.msra.mxu0 0.0
    %618 = vmatpush.msra.mxu0 0.0
    %619 = vmatpush.msra.mxu0 0.0
    %620 = vmatpush.msra.mxu0 0.0
    %621 = vmatpush.msra.mxu0 0.0
    %622 = vmatpush.msra.mxu0 0.0
    %623 = vmatpush.msra.mxu0 0.0
    %624 = vmatpush.msra.mxu0 0.0
    %625 = vmatpush.msra.mxu0 0.0
    %626 = vmatpush.msra.mxu0 %v176
    %627 = vmatpush.msra.mxu0 %v175
    %628 = vmatpush.msra.mxu0 %v174
    %629 = vmatpush.msra.mxu0 %v173
    %630 = vmatmul.f32.gmra.mxu0 %v612
    %v631 = vpop.f32.mrf.mxu0
    %v632 = vadd.f32 0.0, %v631
    %633 = vdwg.mxu0
    %v634 = vadd.f32 %v610, %v632
    %v635 = vxor.u32 %v634, 2147483648
    %v636 = vmul.f32 %v635, 1.442695
    %v637 = vpow.pop %v636
    %v638 = vadd.f32 %v637, 1.0
    %v639 = vrcp.pop %v638
    %v640 = vmul.f32 %v638, %v639
    %v641 = vsub.f32 1.0, %v640
    %v642 = vmul.f32 %v639, %v641
    %v643 = vadd.f32 %v639, %v642
    %vm644 = vweird.f32 %v638
    %vm645 = vweird.f32 %v639
    %vm646 = vmor %vm644, %vm645
    %v647 = vsel %vm646, %v639, %v643
    %v648 = vand.u32 2147483647, %v638
    %vm649 = vcmp.eq.f32.partialorder %v648, 8.507059e+37
    %v650 = vand.u32 %v638, 2147483648
    %v651 = vor.u32 1.1754944e-38, %v650
    %v652 = vsel %vm649, %v651, %v647
    %v653 = vmul.f32 1.0, %v652
    %v654 = vtanh.pop %v634
    %656 = vrot.lane.b32.xlu0 %v518, 32
    %v657 = vpop.permute.xlu0 %656
    %v659 = vmul.f32 %v653, %v657
    %661 = vrot.lane.b32.xlu0 %v654, 32
    %v662 = vpop.permute.xlu0 %661
    %v664 = vmul.f32 %v653, %v662
    %666 = vrot.lane.b32.xlu0 %v664, 32
    %v667 = vpop.permute.xlu0 %666
    %v669 = vadd.f32 %v659, %v667
    %v670 = vtanh.pop %v669
    %672 = vrot.lane.b32.xlu0 %v670, 32
    %v673 = vpop.permute.xlu0 %672
    %v675 = vmul.f32 %v653, %v673
    %v676 = vld [vmem:[%s1 + $0x28] sm:$0xff]
    %678 = vrot.lane.b32.xlu0 %v675, 64
    %v679 = vpop.permute.xlu0 %678
    %v681 = vmul.f32 %v676, %v679
    %683 = vrot.lane.b32.xlu0 %v681, 32
    %v684 = vpop.permute.xlu0 %683
    %s686 = scalar_lea.vmem [#allocation3], 40
    %687 = vst.msk [vmem:[%s686] sm:$0xff] %vm324, %v684
    %688 = vrot.lane.b32.xlu0 %v511, 64
    %v689 = vpop.permute.xlu0 %688
    %v691 = vsub.f32 %v675, %v689
    %693 = vrot.lane.b32.xlu0 %v691, 64
    %v694 = vpop.permute.xlu0 %693
    %v696 = vmul.f32 %v676, %v694
    %v697 = vadd.f32 %v511, %v696
    %v698 = vsub.f32 %v669, %v657
    %700 = vrot.lane.b32.xlu0 %v698, 96
    %v701 = vpop.permute.xlu0 %700
    %v703 = vmul.f32 %v676, %v701
    %v704 = vadd.f32 %v518, %v703
    %v705 = vld [vmem:[#allocation2 + $0x30] sm:$0xff]
    %v707 = vsel %vm178, %v602, 0
    %709 = vmatpush.msra.mxu0 0.0
    %710 = vmatpush.msra.mxu0 0.0
    %711 = vmatpush.msra.mxu0 0.0
    %712 = vmatpush.msra.mxu0 0.0
    %713 = vmatpush.msra.mxu0 0.0
    %714 = vmatpush.msra.mxu0 0.0
    %715 = vmatpush.msra.mxu0 0.0
    %716 = vmatpush.msra.mxu0 0.0
    %717 = vmatpush.msra.mxu0 0.0
    %718 = vmatpush.msra.mxu0 0.0
    %719 = vmatpush.msra.mxu0 0.0
    %720 = vmatpush.msra.mxu0 0.0
    %721 = vmatpush.msra.mxu0 %v172
    %722 = vmatpush.msra.mxu0 %v171
    %723 = vmatpush.msra.mxu0 %v170
    %724 = vmatpush.msra.mxu0 %v169
    %725 = vmatmul.f32.gmra.mxu0 %v707
    %v726 = vpop.f32.mrf.mxu0
    %v727 = vadd.f32 0.0, %v726
    %728 = vdwg.mxu0
    %v729 = vadd.f32 %v705, %v727
    %v730 = vxor.u32 %v729, 2147483648
    %v731 = vmul.f32 %v730, 1.442695
    %v732 = vpow.pop %v731
    %v733 = vadd.f32 %v732, 1.0
    %v734 = vrcp.pop %v733
    %v735 = vmul.f32 %v733, %v734
    %v736 = vsub.f32 1.0, %v735
    %v737 = vmul.f32 %v734, %v736
    %v738 = vadd.f32 %v734, %v737
    %vm739 = vweird.f32 %v733
    %vm740 = vweird.f32 %v734
    %vm741 = vmor %vm739, %vm740
    %v742 = vsel %vm741, %v734, %v738
    %v743 = vand.u32 2147483647, %v733
    %vm744 = vcmp.eq.f32.partialorder %v743, 8.507059e+37
    %v745 = vand.u32 %v733, 2147483648
    %v746 = vor.u32 1.1754944e-38, %v745
    %v747 = vsel %vm744, %v746, %v742
    %v748 = vmul.f32 1.0, %v747
    %v749 = vtanh.pop %v729
    %751 = vrot.lane.b32.xlu0 %v609, 32
    %v752 = vpop.permute.xlu0 %751
    %v754 = vmul.f32 %v748, %v752
    %756 = vrot.lane.b32.xlu0 %v749, 32
    %v757 = vpop.permute.xlu0 %756
    %v759 = vmul.f32 %v748, %v757
    %761 = vrot.lane.b32.xlu0 %v759, 32
    %v762 = vpop.permute.xlu0 %761
    %v764 = vadd.f32 %v754, %v762
    %v765 = vtanh.pop %v764
    %767 = vrot.lane.b32.xlu0 %v765, 32
    %v768 = vpop.permute.xlu0 %767
    %v770 = vmul.f32 %v748, %v768
    %v771 = vld [vmem:[%s1 + $0x18] sm:$0xff]
    %773 = vrot.lane.b32.xlu0 %v770, 64
    %v774 = vpop.permute.xlu0 %773
    %v776 = vmul.f32 %v771, %v774
    %s777 = scalar_lea.vmem [#allocation3], 24
    %778 = vst.msk [vmem:[%s777] sm:$0xff] %vm178, %v776
    %779 = vrot.lane.b32.xlu0 %v602, 64
    %v780 = vpop.permute.xlu0 %779
    %v782 = vsub.f32 %v770, %v780
    %784 = vrot.lane.b32.xlu0 %v782, 64
    %v785 = vpop.permute.xlu0 %784
    %v787 = vmul.f32 %v771, %v785
    %v788 = vadd.f32 %v602, %v787
    %v789 = vsub.f32 %v764, %v752
    %791 = vrot.lane.b32.xlu0 %v789, 96
    %v792 = vpop.permute.xlu0 %791
    %v794 = vmul.f32 %v771, %v792
    %v795 = vadd.f32 %v609, %v794
    %v796 = vld [vmem:[#allocation2 + $0x48] sm:$0xff]
    %v798 = vsel %vm178, %v697, 0
    %800 = vmatpush.msra.mxu0 0.0
    %801 = vmatpush.msra.mxu0 0.0
    %802 = vmatpush.msra.mxu0 0.0
    %803 = vmatpush.msra.mxu0 0.0
    %804 = vmatpush.msra.mxu0 0.0
    %805 = vmatpush.msra.mxu0 0.0
    %806 = vmatpush.msra.mxu0 0.0
    %807 = vmatpush.msra.mxu0 0.0
    %808 = vmatpush.msra.mxu0 0.0
    %809 = vmatpush.msra.mxu0 0.0
    %810 = vmatpush.msra.mxu0 0.0
    %811 = vmatpush.msra.mxu0 0.0
    %812 = vmatpush.msra.mxu0 %v176
    %813 = vmatpush.msra.mxu0 %v175
    %814 = vmatpush.msra.mxu0 %v174
    %815 = vmatpush.msra.mxu0 %v173
    %816 = vmatmul.f32.gmra.mxu0 %v798
    %v817 = vpop.f32.mrf.mxu0
    %v818 = vadd.f32 0.0, %v817
    %819 = vdwg.mxu0
    %v820 = vadd.f32 %v796, %v818
    %v821 = vxor.u32 %v820, 2147483648
    %v822 = vmul.f32 %v821, 1.442695
    %v823 = vpow.pop %v822
    %v824 = vadd.f32 %v823, 1.0
    %v825 = vrcp.pop %v824
    %v826 = vmul.f32 %v824, %v825
    %v827 = vsub.f32 1.0, %v826
    %v828 = vmul.f32 %v825, %v827
    %v829 = vadd.f32 %v825, %v828
    %vm830 = vweird.f32 %v824
    %vm831 = vweird.f32 %v825
    %vm832 = vmor %vm830, %vm831
    %v833 = vsel %vm832, %v825, %v829
    %v834 = vand.u32 2147483647, %v824
    %vm835 = vcmp.eq.f32.partialorder %v834, 8.507059e+37
    %v836 = vand.u32 %v824, 2147483648
    %v837 = vor.u32 1.1754944e-38, %v836
    %v838 = vsel %vm835, %v837, %v833
    %v839 = vmul.f32 1.0, %v838
    %v840 = vtanh.pop %v820
    %842 = vrot.lane.b32.xlu0 %v704, 32
    %v843 = vpop.permute.xlu0 %842
    %v845 = vmul.f32 %v839, %v843
    %847 = vrot.lane.b32.xlu0 %v840, 32
    %v848 = vpop.permute.xlu0 %847
    %v850 = vmul.f32 %v839, %v848
    %852 = vrot.lane.b32.xlu0 %v850, 32
    %v853 = vpop.permute.xlu0 %852
    %v855 = vadd.f32 %v845, %v853
    %v856 = vtanh.pop %v855
    %858 = vrot.lane.b32.xlu0 %v856, 32
    %v859 = vpop.permute.xlu0 %858
    %v861 = vmul.f32 %v839, %v859
    %v862 = vld [vmem:[%s1 + $0x20] sm:$0xff]
    %864 = vrot.lane.b32.xlu0 %v861, 64
    %v865 = vpop.permute.xlu0 %864
    %v867 = vmul.f32 %v862, %v865
    %869 = vrot.lane.b32.xlu0 %v867, 32
    %v870 = vpop.permute.xlu0 %869
    %s872 = scalar_lea.vmem [#allocation3], 32
    %873 = vst.msk [vmem:[%s872] sm:$0xff] %vm324, %v870
    %874 = vrot.lane.b32.xlu0 %v697, 64
    %v875 = vpop.permute.xlu0 %874
    %v877 = vsub.f32 %v861, %v875
    %879 = vrot.lane.b32.xlu0 %v877, 64
    %v880 = vpop.permute.xlu0 %879
    %v882 = vmul.f32 %v862, %v880
    %v883 = vadd.f32 %v697, %v882
    %v884 = vsub.f32 %v855, %v843
    %886 = vrot.lane.b32.xlu0 %v884, 96
    %v887 = vpop.permute.xlu0 %886
    %v889 = vmul.f32 %v862, %v887
    %v890 = vadd.f32 %v704, %v889
    %v891 = vld [vmem:[#allocation2 + $0x40] sm:$0xff]
    %v893 = vsel %vm178, %v788, 0
    %895 = vmatpush.msra.mxu0 0.0
    %896 = vmatpush.msra.mxu0 0.0
    %897 = vmatpush.msra.mxu0 0.0
    %898 = vmatpush.msra.mxu0 0.0
    %899 = vmatpush.msra.mxu0 0.0
    %900 = vmatpush.msra.mxu0 0.0
    %901 = vmatpush.msra.mxu0 0.0
    %902 = vmatpush.msra.mxu0 0.0
    %903 = vmatpush.msra.mxu0 0.0
    %904 = vmatpush.msra.mxu0 0.0
    %905 = vmatpush.msra.mxu0 0.0
    %906 = vmatpush.msra.mxu0 0.0
    %907 = vmatpush.msra.mxu0 %v172
    %908 = vmatpush.msra.mxu0 %v171
    %909 = vmatpush.msra.mxu0 %v170
    %910 = vmatpush.msra.mxu0 %v169
    %911 = vmatmul.f32.gmra.mxu0 %v893
    %v912 = vpop.f32.mrf.mxu0
    %v913 = vadd.f32 0.0, %v912
    %914 = vdwg.mxu0
    %v915 = vadd.f32 %v891, %v913
    %v916 = vxor.u32 %v915, 2147483648
    %v917 = vmul.f32 %v916, 1.442695
    %v918 = vpow.pop %v917
    %v919 = vadd.f32 %v918, 1.0
    %v920 = vrcp.pop %v919
    %v921 = vmul.f32 %v919, %v920
    %v922 = vsub.f32 1.0, %v921
    %v923 = vmul.f32 %v920, %v922
    %v924 = vadd.f32 %v920, %v923
    %vm925 = vweird.f32 %v919
    %vm926 = vweird.f32 %v920
    %vm927 = vmor %vm925, %vm926
    %v928 = vsel %vm927, %v920, %v924
    %v929 = vand.u32 2147483647, %v919
    %vm930 = vcmp.eq.f32.partialorder %v929, 8.507059e+37
    %v931 = vand.u32 %v919, 2147483648
    %v932 = vor.u32 1.1754944e-38, %v931
    %v933 = vsel %vm930, %v932, %v928
    %v934 = vmul.f32 1.0, %v933
    %v935 = vtanh.pop %v915
    %937 = vrot.lane.b32.xlu0 %v795, 32
    %v938 = vpop.permute.xlu0 %937
    %v940 = vmul.f32 %v934, %v938
    %942 = vrot.lane.b32.xlu0 %v935, 32
    %v943 = vpop.permute.xlu0 %942
    %v945 = vmul.f32 %v934, %v943
    %947 = vrot.lane.b32.xlu0 %v945, 32
    %v948 = vpop.permute.xlu0 %947
    %v950 = vadd.f32 %v940, %v948
    %v951 = vtanh.pop %v950
    %953 = vrot.lane.b32.xlu0 %v951, 32
    %v954 = vpop.permute.xlu0 %953
    %v956 = vmul.f32 %v934, %v954
    %v957 = vld [vmem:[%s1 + $0x20] sm:$0xff]
    %959 = vrot.lane.b32.xlu0 %v956, 64
    %v960 = vpop.permute.xlu0 %959
    %v962 = vmul.f32 %v957, %v960
    %963 = vst.msk [vmem:[%s872] sm:$0xff] %vm178, %v962
    %964 = vrot.lane.b32.xlu0 %v788, 64
    %v965 = vpop.permute.xlu0 %964
    %v967 = vsub.f32 %v956, %v965
    %969 = vrot.lane.b32.xlu0 %v967, 64
    %v970 = vpop.permute.xlu0 %969
    %v972 = vmul.f32 %v957, %v970
    %v973 = vadd.f32 %v788, %v972
    %v974 = vsub.f32 %v950, %v938
    %976 = vrot.lane.b32.xlu0 %v974, 96
    %v977 = vpop.permute.xlu0 %976
    %v979 = vmul.f32 %v957, %v977
    %v980 = vadd.f32 %v795, %v979
    %v981 = vld [vmem:[#allocation2 + $0x38] sm:$0xff]
    %v983 = vsel %vm178, %v883, 0
    %985 = vmatpush.msra.mxu0 0.0
    %986 = vmatpush.msra.mxu0 0.0
    %987 = vmatpush.msra.mxu0 0.0
    %988 = vmatpush.msra.mxu0 0.0
    %989 = vmatpush.msra.mxu0 0.0
    %990 = vmatpush.msra.mxu0 0.0
    %991 = vmatpush.msra.mxu0 0.0
    %992 = vmatpush.msra.mxu0 0.0
    %993 = vmatpush.msra.mxu0 0.0
    %994 = vmatpush.msra.mxu0 0.0
    %995 = vmatpush.msra.mxu0 0.0
    %996 = vmatpush.msra.mxu0 0.0
    %997 = vmatpush.msra.mxu0 %v176
    %998 = vmatpush.msra.mxu0 %v175
    %999 = vmatpush.msra.mxu0 %v174
    %1000 = vmatpush.msra.mxu0 %v173
    %1001 = vmatmul.f32.gmra.mxu0 %v983
    %v1002 = vpop.f32.mrf.mxu0
    %v1003 = vadd.f32 0.0, %v1002
    %1004 = vdwg.mxu0
    %v1005 = vadd.f32 %v981, %v1003
    %v1006 = vxor.u32 %v1005, 2147483648
    %v1007 = vmul.f32 %v1006, 1.442695
    %v1008 = vpow.pop %v1007
    %v1009 = vadd.f32 %v1008, 1.0
    %v1010 = vrcp.pop %v1009
    %v1011 = vmul.f32 %v1009, %v1010
    %v1012 = vsub.f32 1.0, %v1011
    %v1013 = vmul.f32 %v1010, %v1012
    %v1014 = vadd.f32 %v1010, %v1013
    %vm1015 = vweird.f32 %v1009
    %vm1016 = vweird.f32 %v1010
    %vm1017 = vmor %vm1015, %vm1016
    %v1018 = vsel %vm1017, %v1010, %v1014
    %v1019 = vand.u32 2147483647, %v1009
    %vm1020 = vcmp.eq.f32.partialorder %v1019, 8.507059e+37
    %v1021 = vand.u32 %v1009, 2147483648
    %v1022 = vor.u32 1.1754944e-38, %v1021
    %v1023 = vsel %vm1020, %v1022, %v1018
    %v1024 = vmul.f32 1.0, %v1023
    %v1025 = vtanh.pop %v1005
    %1027 = vrot.lane.b32.xlu0 %v890, 32
    %v1028 = vpop.permute.xlu0 %1027
    %v1030 = vmul.f32 %v1024, %v1028
    %1032 = vrot.lane.b32.xlu0 %v1025, 32
    %v1033 = vpop.permute.xlu0 %1032
    %v1035 = vmul.f32 %v1024, %v1033
    %1037 = vrot.lane.b32.xlu0 %v1035, 32
    %v1038 = vpop.permute.xlu0 %1037
    %v1040 = vadd.f32 %v1030, %v1038
    %v1041 = vtanh.pop %v1040
    %1043 = vrot.lane.b32.xlu0 %v1041, 32
    %v1044 = vpop.permute.xlu0 %1043
    %v1046 = vmul.f32 %v1024, %v1044
    %v1047 = vld [vmem:[%s1 + $0x18] sm:$0xff]
    %1049 = vrot.lane.b32.xlu0 %v1046, 64
    %v1050 = vpop.permute.xlu0 %1049
    %v1052 = vmul.f32 %v1047, %v1050
    %1054 = vrot.lane.b32.xlu0 %v1052, 32
    %v1055 = vpop.permute.xlu0 %1054
    %1057 = vst.msk [vmem:[%s777] sm:$0xff] %vm324, %v1055
    %1058 = vrot.lane.b32.xlu0 %v883, 64
    %v1059 = vpop.permute.xlu0 %1058
    %v1061 = vsub.f32 %v1046, %v1059
    %1063 = vrot.lane.b32.xlu0 %v1061, 64
    %v1064 = vpop.permute.xlu0 %1063
    %v1066 = vmul.f32 %v1047, %v1064
    %v1067 = vadd.f32 %v883, %v1066
    %v1068 = vsub.f32 %v1040, %v1028
    %1070 = vrot.lane.b32.xlu0 %v1068, 96
    %v1071 = vpop.permute.xlu0 %1070
    %v1073 = vmul.f32 %v1047, %v1071
    %v1074 = vadd.f32 %v890, %v1073
    %v1075 = vld [vmem:[#allocation2 + $0x50] sm:$0xff]
    %v1077 = vsel %vm178, %v973, 0
    %1079 = vmatpush.msra.mxu0 0.0
    %1080 = vmatpush.msra.mxu0 0.0
    %1081 = vmatpush.msra.mxu0 0.0
    %1082 = vmatpush.msra.mxu0 0.0
    %1083 = vmatpush.msra.mxu0 0.0
    %1084 = vmatpush.msra.mxu0 0.0
    %1085 = vmatpush.msra.mxu0 0.0
    %1086 = vmatpush.msra.mxu0 0.0
    %1087 = vmatpush.msra.mxu0 0.0
    %1088 = vmatpush.msra.mxu0 0.0
    %1089 = vmatpush.msra.mxu0 0.0
    %1090 = vmatpush.msra.mxu0 0.0
    %1091 = vmatpush.msra.mxu0 %v172
    %1092 = vmatpush.msra.mxu0 %v171
    %1093 = vmatpush.msra.mxu0 %v170
    %1094 = vmatpush.msra.mxu0 %v169
    %1095 = vmatmul.f32.gmra.mxu0 %v1077
    %v1096 = vpop.f32.mrf.mxu0
    %v1097 = vadd.f32 0.0, %v1096
    %1098 = vdwg.mxu0
    %v1099 = vadd.f32 %v1075, %v1097
    %v1100 = vxor.u32 %v1099, 2147483648
    %v1101 = vmul.f32 %v1100, 1.442695
    %v1102 = vpow.pop %v1101
    %v1103 = vadd.f32 %v1102, 1.0
    %v1104 = vrcp.pop %v1103
    %v1105 = vmul.f32 %v1103, %v1104
    %v1106 = vsub.f32 1.0, %v1105
    %v1107 = vmul.f32 %v1104, %v1106
    %v1108 = vadd.f32 %v1104, %v1107
    %vm1109 = vweird.f32 %v1103
    %vm1110 = vweird.f32 %v1104
    %vm1111 = vmor %vm1109, %vm1110
    %v1112 = vsel %vm1111, %v1104, %v1108
    %v1113 = vand.u32 2147483647, %v1103
    %vm1114 = vcmp.eq.f32.partialorder %v1113, 8.507059e+37
    %v1115 = vand.u32 %v1103, 2147483648
    %v1116 = vor.u32 1.1754944e-38, %v1115
    %v1117 = vsel %vm1114, %v1116, %v1112
    %v1118 = vmul.f32 1.0, %v1117
    %v1119 = vtanh.pop %v1099
    %1121 = vrot.lane.b32.xlu0 %v980, 32
    %v1122 = vpop.permute.xlu0 %1121
    %v1124 = vmul.f32 %v1118, %v1122
    %1126 = vrot.lane.b32.xlu0 %v1119, 32
    %v1127 = vpop.permute.xlu0 %1126
    %v1129 = vmul.f32 %v1118, %v1127
    %1131 = vrot.lane.b32.xlu0 %v1129, 32
    %v1132 = vpop.permute.xlu0 %1131
    %v1134 = vadd.f32 %v1124, %v1132
    %v1135 = vtanh.pop %v1134
    %1137 = vrot.lane.b32.xlu0 %v1135, 32
    %v1138 = vpop.permute.xlu0 %1137
    %v1140 = vmul.f32 %v1118, %v1138
    %v1141 = vld [vmem:[%s1 + $0x28] sm:$0xff]
    %1143 = vrot.lane.b32.xlu0 %v1140, 64
    %v1144 = vpop.permute.xlu0 %1143
    %v1146 = vmul.f32 %v1141, %v1144
    %1147 = vst.msk [vmem:[%s686] sm:$0xff] %vm178, %v1146
    %1148 = vrot.lane.b32.xlu0 %v973, 64
    %v1149 = vpop.permute.xlu0 %1148
    %v1151 = vsub.f32 %v1140, %v1149
    %1153 = vrot.lane.b32.xlu0 %v1151, 64
    %v1154 = vpop.permute.xlu0 %1153
    %v1156 = vmul.f32 %v1141, %v1154
    %v1157 = vadd.f32 %v973, %v1156
    %v1158 = vsub.f32 %v1134, %v1122
    %1160 = vrot.lane.b32.xlu0 %v1158, 96
    %v1161 = vpop.permute.xlu0 %1160
    %v1163 = vmul.f32 %v1141, %v1161
    %v1164 = vadd.f32 %v980, %v1163
    %v1165 = vld [vmem:[#allocation2 + $0x28] sm:$0xff]
    %v1167 = vsel %vm178, %v1067, 0
    %1169 = vmatpush.msra.mxu0 0.0
    %1170 = vmatpush.msra.mxu0 0.0
    %1171 = vmatpush.msra.mxu0 0.0
    %1172 = vmatpush.msra.mxu0 0.0
    %1173 = vmatpush.msra.mxu0 0.0
    %1174 = vmatpush.msra.mxu0 0.0
    %1175 = vmatpush.msra.mxu0 0.0
    %1176 = vmatpush.msra.mxu0 0.0
    %1177 = vmatpush.msra.mxu0 0.0
    %1178 = vmatpush.msra.mxu0 0.0
    %1179 = vmatpush.msra.mxu0 0.0
    %1180 = vmatpush.msra.mxu0 0.0
    %1181 = vmatpush.msra.mxu0 %v176
    %1182 = vmatpush.msra.mxu0 %v175
    %1183 = vmatpush.msra.mxu0 %v174
    %1184 = vmatpush.msra.mxu0 %v173
    %1185 = vmatmul.f32.gmra.mxu0 %v1167
    %v1186 = vpop.f32.mrf.mxu0
    %v1187 = vadd.f32 0.0, %v1186
    %1188 = vdwg.mxu0
    %v1189 = vadd.f32 %v1165, %v1187
    %v1190 = vxor.u32 %v1189, 2147483648
    %v1191 = vmul.f32 %v1190, 1.442695
    %v1192 = vpow.pop %v1191
    %v1193 = vadd.f32 %v1192, 1.0
    %v1194 = vrcp.pop %v1193
    %v1195 = vmul.f32 %v1193, %v1194
    %v1196 = vsub.f32 1.0, %v1195
    %v1197 = vmul.f32 %v1194, %v1196
    %v1198 = vadd.f32 %v1194, %v1197
    %vm1199 = vweird.f32 %v1193
    %vm1200 = vweird.f32 %v1194
    %vm1201 = vmor %vm1199, %vm1200
    %v1202 = vsel %vm1201, %v1194, %v1198
    %v1203 = vand.u32 2147483647, %v1193
    %vm1204 = vcmp.eq.f32.partialorder %v1203, 8.507059e+37
    %v1205 = vand.u32 %v1193, 2147483648
    %v1206 = vor.u32 1.1754944e-38, %v1205
    %v1207 = vsel %vm1204, %v1206, %v1202
    %v1208 = vmul.f32 1.0, %v1207
    %v1209 = vtanh.pop %v1189
    %1211 = vrot.lane.b32.xlu0 %v1074, 32
    %v1212 = vpop.permute.xlu0 %1211
    %v1214 = vmul.f32 %v1208, %v1212
    %1216 = vrot.lane.b32.xlu0 %v1209, 32
    %v1217 = vpop.permute.xlu0 %1216
    %v1219 = vmul.f32 %v1208, %v1217
    %1221 = vrot.lane.b32.xlu0 %v1219, 32
    %v1222 = vpop.permute.xlu0 %1221
    %v1224 = vadd.f32 %v1214, %v1222
    %v1225 = vtanh.pop %v1224
    %1227 = vrot.lane.b32.xlu0 %v1225, 32
    %v1228 = vpop.permute.xlu0 %1227
    %v1230 = vmul.f32 %v1208, %v1228
    %v1231 = vld [vmem:[%s1 + $0x10] sm:$0xff]
    %1233 = vrot.lane.b32.xlu0 %v1230, 64
    %v1234 = vpop.permute.xlu0 %1233
    %v1236 = vmul.f32 %v1231, %v1234
    %1238 = vrot.lane.b32.xlu0 %v1236, 32
    %v1239 = vpop.permute.xlu0 %1238
    %1241 = vst.msk [vmem:[%s591] sm:$0xff] %vm324, %v1239
    %1242 = vrot.lane.b32.xlu0 %v1067, 64
    %v1243 = vpop.permute.xlu0 %1242
    %v1245 = vsub.f32 %v1230, %v1243
    %1247 = vrot.lane.b32.xlu0 %v1245, 64
    %v1248 = vpop.permute.xlu0 %1247
    %v1250 = vmul.f32 %v1231, %v1248
    %v1251 = vadd.f32 %v1067, %v1250
    %v1252 = vsub.f32 %v1224, %v1212
    %1254 = vrot.lane.b32.xlu0 %v1252, 96
    %v1255 = vpop.permute.xlu0 %1254
    %v1257 = vmul.f32 %v1231, %v1255
    %v1258 = vadd.f32 %v1074, %v1257
    %v1259 = vld [vmem:[#allocation2 + $0x60] sm:$0xff]
    %v1261 = vsel %vm178, %v1157, 0
    %1263 = vmatpush.msra.mxu0 0.0
    %1264 = vmatpush.msra.mxu0 0.0
    %1265 = vmatpush.msra.mxu0 0.0
    %1266 = vmatpush.msra.mxu0 0.0
    %1267 = vmatpush.msra.mxu0 0.0
    %1268 = vmatpush.msra.mxu0 0.0
    %1269 = vmatpush.msra.mxu0 0.0
    %1270 = vmatpush.msra.mxu0 0.0
    %1271 = vmatpush.msra.mxu0 0.0
    %1272 = vmatpush.msra.mxu0 0.0
    %1273 = vmatpush.msra.mxu0 0.0
    %1274 = vmatpush.msra.mxu0 0.0
    %1275 = vmatpush.msra.mxu0 %v172
    %1276 = vmatpush.msra.mxu0 %v171
    %1277 = vmatpush.msra.mxu0 %v170
    %1278 = vmatpush.msra.mxu0 %v169
    %1279 = vmatmul.f32.gmra.mxu0 %v1261
    %v1280 = vpop.f32.mrf.mxu0
    %v1281 = vadd.f32 0.0, %v1280
    %1282 = vdwg.mxu0
    %v1283 = vadd.f32 %v1259, %v1281
    %v1284 = vxor.u32 %v1283, 2147483648
    %v1285 = vmul.f32 %v1284, 1.442695
    %v1286 = vpow.pop %v1285
    %v1287 = vadd.f32 %v1286, 1.0
    %v1288 = vrcp.pop %v1287
    %v1289 = vmul.f32 %v1287, %v1288
    %v1290 = vsub.f32 1.0, %v1289
    %v1291 = vmul.f32 %v1288, %v1290
    %v1292 = vadd.f32 %v1288, %v1291
    %vm1293 = vweird.f32 %v1287
    %vm1294 = vweird.f32 %v1288
    %vm1295 = vmor %vm1293, %vm1294
    %v1296 = vsel %vm1295, %v1288, %v1292
    %v1297 = vand.u32 2147483647, %v1287
    %vm1298 = vcmp.eq.f32.partialorder %v1297, 8.507059e+37
    %v1299 = vand.u32 %v1287, 2147483648
    %v1300 = vor.u32 1.1754944e-38, %v1299
    %v1301 = vsel %vm1298, %v1300, %v1296
    %v1302 = vmul.f32 1.0, %v1301
    %v1303 = vtanh.pop %v1283
    %1305 = vrot.lane.b32.xlu0 %v1164, 32
    %v1306 = vpop.permute.xlu0 %1305
    %v1308 = vmul.f32 %v1302, %v1306
    %1310 = vrot.lane.b32.xlu0 %v1303, 32
    %v1311 = vpop.permute.xlu0 %1310
    %v1313 = vmul.f32 %v1302, %v1311
    %1315 = vrot.lane.b32.xlu0 %v1313, 32
    %v1316 = vpop.permute.xlu0 %1315
    %v1318 = vadd.f32 %v1308, %v1316
    %v1319 = vtanh.pop %v1318
    %1321 = vrot.lane.b32.xlu0 %v1319, 32
    %v1322 = vpop.permute.xlu0 %1321
    %v1324 = vmul.f32 %v1302, %v1322
    %v1325 = vld [vmem:[%s1 + $0x30] sm:$0xff]
    %1327 = vrot.lane.b32.xlu0 %v1324, 64
    %v1328 = vpop.permute.xlu0 %1327
    %v1330 = vmul.f32 %v1325, %v1328
    %1331 = vst.msk [vmem:[%s500] sm:$0xff] %vm178, %v1330
    %1332 = vrot.lane.b32.xlu0 %v1157, 64
    %v1333 = vpop.permute.xlu0 %1332
    %v1335 = vsub.f32 %v1324, %v1333
    %1337 = vrot.lane.b32.xlu0 %v1335, 64
    %v1338 = vpop.permute.xlu0 %1337
    %v1340 = vmul.f32 %v1325, %v1338
    %v1341 = vadd.f32 %v1157, %v1340
    %v1342 = vsub.f32 %v1318, %v1306
    %1344 = vrot.lane.b32.xlu0 %v1342, 96
    %v1345 = vpop.permute.xlu0 %1344
    %v1347 = vmul.f32 %v1325, %v1345
    %v1348 = vadd.f32 %v1164, %v1347
    %v1349 = vld [vmem:[#allocation2 + $0x18] sm:$0xff]
    %v1351 = vsel %vm178, %v1251, 0
    %1353 = vmatpush.msra.mxu0 0.0
    %1354 = vmatpush.msra.mxu0 0.0
    %1355 = vmatpush.msra.mxu0 0.0
    %1356 = vmatpush.msra.mxu0 0.0
    %1357 = vmatpush.msra.mxu0 0.0
    %1358 = vmatpush.msra.mxu0 0.0
    %1359 = vmatpush.msra.mxu0 0.0
    %1360 = vmatpush.msra.mxu0 0.0
    %1361 = vmatpush.msra.mxu0 0.0
    %1362 = vmatpush.msra.mxu0 0.0
    %1363 = vmatpush.msra.mxu0 0.0
    %1364 = vmatpush.msra.mxu0 0.0
    %1365 = vmatpush.msra.mxu0 %v176
    %1366 = vmatpush.msra.mxu0 %v175
    %1367 = vmatpush.msra.mxu0 %v174
    %1368 = vmatpush.msra.mxu0 %v173
    %1369 = vmatmul.f32.gmra.mxu0 %v1351
    %v1370 = vpop.f32.mrf.mxu0
    %v1371 = vadd.f32 0.0, %v1370
    %1372 = vdwg.mxu0
    %v1373 = vadd.f32 %v1349, %v1371
    %v1374 = vxor.u32 %v1373, 2147483648
    %v1375 = vmul.f32 %v1374, 1.442695
    %v1376 = vpow.pop %v1375
    %v1377 = vadd.f32 %v1376, 1.0
    %v1378 = vrcp.pop %v1377
    %v1379 = vmul.f32 %v1377, %v1378
    %v1380 = vsub.f32 1.0, %v1379
    %v1381 = vmul.f32 %v1378, %v1380
    %v1382 = vadd.f32 %v1378, %v1381
    %vm1383 = vweird.f32 %v1377
    %vm1384 = vweird.f32 %v1378
    %vm1385 = vmor %vm1383, %vm1384
    %v1386 = vsel %vm1385, %v1378, %v1382
    %v1387 = vand.u32 2147483647, %v1377
    %vm1388 = vcmp.eq.f32.partialorder %v1387, 8.507059e+37
    %v1389 = vand.u32 %v1377, 2147483648
    %v1390 = vor.u32 1.1754944e-38, %v1389
    %v1391 = vsel %vm1388, %v1390, %v1386
    %v1392 = vmul.f32 1.0, %v1391
    %v1393 = vtanh.pop %v1373
    %1395 = vrot.lane.b32.xlu0 %v1258, 32
    %v1396 = vpop.permute.xlu0 %1395
    %v1398 = vmul.f32 %v1392, %v1396
    %1400 = vrot.lane.b32.xlu0 %v1393, 32
    %v1401 = vpop.permute.xlu0 %1400
    %v1403 = vmul.f32 %v1392, %v1401
    %1405 = vrot.lane.b32.xlu0 %v1403, 32
    %v1406 = vpop.permute.xlu0 %1405
    %v1408 = vadd.f32 %v1398, %v1406
    %v1409 = vtanh.pop %v1408
    %1411 = vrot.lane.b32.xlu0 %v1409, 32
    %v1412 = vpop.permute.xlu0 %1411
    %v1414 = vmul.f32 %v1392, %v1412
    %v1415 = vld [vmem:[%s1 + $0x8] sm:$0xff]
    %1417 = vrot.lane.b32.xlu0 %v1414, 64
    %v1418 = vpop.permute.xlu0 %1417
    %v1420 = vmul.f32 %v1415, %v1418
    %1422 = vrot.lane.b32.xlu0 %v1420, 32
    %v1423 = vpop.permute.xlu0 %1422
    %1425 = vst.msk [vmem:[%s405] sm:$0xff] %vm324, %v1423
    %1426 = vrot.lane.b32.xlu0 %v1251, 64
    %v1427 = vpop.permute.xlu0 %1426
    %v1429 = vsub.f32 %v1414, %v1427
    %1431 = vrot.lane.b32.xlu0 %v1429, 64
    %v1432 = vpop.permute.xlu0 %1431
    %v1434 = vmul.f32 %v1415, %v1432
    %v1435 = vadd.f32 %v1251, %v1434
    %v1436 = vsub.f32 %v1408, %v1396
    %1438 = vrot.lane.b32.xlu0 %v1436, 96
    %v1439 = vpop.permute.xlu0 %1438
    %v1441 = vmul.f32 %v1415, %v1439
    %v1442 = vadd.f32 %v1258, %v1441
    %v1443 = vld [vmem:[#allocation2 + $0x70] sm:$0xff]
    %v1445 = vsel %vm178, %v1341, 0
    %1447 = vmatpush.msra.mxu0 0.0
    %1448 = vmatpush.msra.mxu0 0.0
    %1449 = vmatpush.msra.mxu0 0.0
    %1450 = vmatpush.msra.mxu0 0.0
    %1451 = vmatpush.msra.mxu0 0.0
    %1452 = vmatpush.msra.mxu0 0.0
    %1453 = vmatpush.msra.mxu0 0.0
    %1454 = vmatpush.msra.mxu0 0.0
    %1455 = vmatpush.msra.mxu0 0.0
    %1456 = vmatpush.msra.mxu0 0.0
    %1457 = vmatpush.msra.mxu0 0.0
    %1458 = vmatpush.msra.mxu0 0.0
    %1459 = vmatpush.msra.mxu0 %v172
    %1460 = vmatpush.msra.mxu0 %v171
    %1461 = vmatpush.msra.mxu0 %v170
    %1462 = vmatpush.msra.mxu0 %v169
    %1463 = vmatmul.f32.gmra.mxu0 %v1445
    %v1464 = vpop.f32.mrf.mxu0
    %v1465 = vadd.f32 0.0, %v1464
    %1466 = vdwg.mxu0
    %v1467 = vadd.f32 %v1443, %v1465
    %v1468 = vxor.u32 %v1467, 2147483648
    %v1469 = vmul.f32 %v1468, 1.442695
    %v1470 = vpow.pop %v1469
    %v1471 = vadd.f32 %v1470, 1.0
    %v1472 = vrcp.pop %v1471
    %v1473 = vmul.f32 %v1471, %v1472
    %v1474 = vsub.f32 1.0, %v1473
    %v1475 = vmul.f32 %v1472, %v1474
    %v1476 = vadd.f32 %v1472, %v1475
    %vm1477 = vweird.f32 %v1471
    %vm1478 = vweird.f32 %v1472
    %vm1479 = vmor %vm1477, %vm1478
    %v1480 = vsel %vm1479, %v1472, %v1476
    %v1481 = vand.u32 2147483647, %v1471
    %vm1482 = vcmp.eq.f32.partialorder %v1481, 8.507059e+37
    %v1483 = vand.u32 %v1471, 2147483648
    %v1484 = vor.u32 1.1754944e-38, %v1483
    %v1485 = vsel %vm1482, %v1484, %v1480
    %v1486 = vmul.f32 1.0, %v1485
    %v1487 = vtanh.pop %v1467
    %1489 = vrot.lane.b32.xlu0 %v1348, 32
    %v1490 = vpop.permute.xlu0 %1489
    %v1492 = vmul.f32 %v1486, %v1490
    %1494 = vrot.lane.b32.xlu0 %v1487, 32
    %v1495 = vpop.permute.xlu0 %1494
    %v1497 = vmul.f32 %v1486, %v1495
    %1499 = vrot.lane.b32.xlu0 %v1497, 32
    %v1500 = vpop.permute.xlu0 %1499
    %v1502 = vadd.f32 %v1492, %v1500
    %v1503 = vtanh.pop %v1502
    %1505 = vrot.lane.b32.xlu0 %v1503, 32
    %v1506 = vpop.permute.xlu0 %1505
    %v1508 = vmul.f32 %v1486, %v1506
    %v1509 = vld [vmem:[%s1 + $0x38] sm:$0xff]
    %1511 = vrot.lane.b32.xlu0 %v1508, 64
    %v1512 = vpop.permute.xlu0 %1511
    %v1514 = vmul.f32 %v1509, %v1512
    %1515 = vst.msk [vmem:[%s323] sm:$0xff] %vm178, %v1514
    %1516 = vrot.lane.b32.xlu0 %v1341, 64
    %v1517 = vpop.permute.xlu0 %1516
    %v1519 = vsub.f32 %v1508, %v1517
    %1521 = vrot.lane.b32.xlu0 %v1519, 64
    %v1522 = vpop.permute.xlu0 %1521
    %v1524 = vmul.f32 %v1509, %v1522
    %v1525 = vadd.f32 %v1341, %v1524
    %v1526 = vsub.f32 %v1502, %v1490
    %1528 = vrot.lane.b32.xlu0 %v1526, 96
    %v1529 = vpop.permute.xlu0 %1528
    %v1531 = vmul.f32 %v1509, %v1529
    %v1532 = vadd.f32 %v1348, %v1531
    %v1533 = vld [vmem:[#allocation2 + $0x8] sm:$0xff]
    %v1535 = vsel %vm178, %v1435, 0
    %1537 = vmatpush.msra.mxu0 0.0
    %1538 = vmatpush.msra.mxu0 0.0
    %1539 = vmatpush.msra.mxu0 0.0
    %1540 = vmatpush.msra.mxu0 0.0
    %1541 = vmatpush.msra.mxu0 0.0
    %1542 = vmatpush.msra.mxu0 0.0
    %1543 = vmatpush.msra.mxu0 0.0
    %1544 = vmatpush.msra.mxu0 0.0
    %1545 = vmatpush.msra.mxu0 0.0
    %1546 = vmatpush.msra.mxu0 0.0
    %1547 = vmatpush.msra.mxu0 0.0
    %1548 = vmatpush.msra.mxu0 0.0
    %1549 = vmatpush.msra.mxu0 %v176
    %1550 = vmatpush.msra.mxu0 %v175
    %1551 = vmatpush.msra.mxu0 %v174
    %1552 = vmatpush.msra.mxu0 %v173
    %1553 = vmatmul.f32.gmra.mxu0 %v1535
    %v1554 = vpop.f32.mrf.mxu0
    %v1555 = vadd.f32 0.0, %v1554
    %1556 = vdwg.mxu0
    %v1557 = vadd.f32 %v1533, %v1555
    %v1558 = vxor.u32 %v1557, 2147483648
    %v1559 = vmul.f32 %v1558, 1.442695
    %v1560 = vpow.pop %v1559
    %v1561 = vadd.f32 %v1560, 1.0
    %v1562 = vrcp.pop %v1561
    %v1563 = vmul.f32 %v1561, %v1562
    %v1564 = vsub.f32 1.0, %v1563
    %v1565 = vmul.f32 %v1562, %v1564
    %v1566 = vadd.f32 %v1562, %v1565
    %vm1567 = vweird.f32 %v1561
    %vm1568 = vweird.f32 %v1562
    %vm1569 = vmor %vm1567, %vm1568
    %v1570 = vsel %vm1569, %v1562, %v1566
    %v1571 = vand.u32 2147483647, %v1561
    %vm1572 = vcmp.eq.f32.partialorder %v1571, 8.507059e+37
    %v1573 = vand.u32 %v1561, 2147483648
    %v1574 = vor.u32 1.1754944e-38, %v1573
    %v1575 = vsel %vm1572, %v1574, %v1570
    %v1576 = vmul.f32 1.0, %v1575
    %v1577 = vtanh.pop %v1557
    %1579 = vrot.lane.b32.xlu0 %v1442, 32
    %v1580 = vpop.permute.xlu0 %1579
    %v1582 = vmul.f32 %v1576, %v1580
    %1584 = vrot.lane.b32.xlu0 %v1577, 32
    %v1585 = vpop.permute.xlu0 %1584
    %v1587 = vmul.f32 %v1576, %v1585
    %1589 = vrot.lane.b32.xlu0 %v1587, 32
    %v1590 = vpop.permute.xlu0 %1589
    %v1592 = vadd.f32 %v1582, %v1590
    %v1593 = vtanh.pop %v1592
    %1595 = vrot.lane.b32.xlu0 %v1593, 32
    %v1596 = vpop.permute.xlu0 %1595
    %v1598 = vmul.f32 %v1576, %v1596
    %v1599 = vld [vmem:[%s1] sm:$0xff]
    %1601 = vrot.lane.b32.xlu0 %v1598, 64
    %v1602 = vpop.permute.xlu0 %1601
    %v1604 = vmul.f32 %v1599, %v1602
    %1606 = vrot.lane.b32.xlu0 %v1604, 32
    %v1607 = vpop.permute.xlu0 %1606
    %1609 = vst.msk [vmem:[#allocation3] sm:$0xff] %vm324, %v1607
    %1610 = vrot.lane.b32.xlu0 %v1435, 64
    %v1611 = vpop.permute.xlu0 %1610
    %v1613 = vsub.f32 %v1598, %v1611
    %1615 = vrot.lane.b32.xlu0 %v1613, 64
    %v1616 = vpop.permute.xlu0 %1615
    %v1618 = vmul.f32 %v1599, %v1616
    %v1619 = vadd.f32 %v1435, %v1618
    %v1620 = vsub.f32 %v1592, %v1580
    %1622 = vrot.lane.b32.xlu0 %v1620, 96
    %v1623 = vpop.permute.xlu0 %1622
    %v1625 = vmul.f32 %v1599, %v1623
    %v1626 = vadd.f32 %v1442, %v1625
    %1627 = vst.msk [vmem:[#allocation5] sm:$0xff] %vm178, %v1525
    %s1628 = scalar_lea.vmem [#allocation5], 8
    %1629 = vst.msk [vmem:[%s1628] sm:$0xff] %vm178, %v1619
    %1630 = vst.msk [vmem:[#allocation7] sm:$0xff] %vm178, %v1532
    %s1631 = scalar_lea.vmem [#allocation7], 8
    %1632 = vst.msk [vmem:[%s1631] sm:$0xff] %vm178, %v1626
    // Predicated region
    $region26: #{tpu_custom_call.1} parent=1 // pred_check
      _
    $region27: #{tpu_custom_call.1} parent=1 // pred_check_branch
      %1634 = sbr.rel (0) target = $region29
    $region28: #{tpu_custom_call.1} parent=1 // pred_region
      %1636 = vsyncadd [#allocation4], 0
      %s1637 = sshll.u32 [#allocation3], 4
      %s1638 = int_to_ptr.vmem [resolvable:$true] %s1637
      %s1639 = sshll.u32 %s6, 4
      %s1640 = int_to_ptr.hbm [resolvable:$true] %s1639
      %1645 = dma.vmem_to_hbm [thread:$0]  %s1638, 1024, %s1640, [#allocation4], 128, 128, 8
    $region29: #{tpu_custom_call.1} parent=1 // pred_fallthru
      _
    // Predicated region
    $region30: #{tpu_custom_call.1} parent=1 // pred_check
      _
    $region31: #{tpu_custom_call.1} parent=1 // pred_check_branch
      %1647 = sbr.rel (0) target = $region33
    $region32: #{tpu_custom_call.1} parent=1 // pred_region
      %1649 = vsyncadd [#allocation6], 0
      %s1650 = sshll.u32 [#allocation5], 4
      %s1651 = int_to_ptr.vmem [resolvable:$true] %s1650
      %s1652 = sshll.u32 %s7, 4
      %s1653 = int_to_ptr.hbm [resolvable:$true] %s1652
      %1658 = dma.vmem_to_hbm [thread:$0]  %s1651, 256, %s1653, [#allocation6], 128, 128, 8
    $region33: #{tpu_custom_call.1} parent=1 // pred_fallthru
      _
    // Predicated region
    $region34: #{tpu_custom_call.1} parent=1 // pred_check
      _
    $region35: #{tpu_custom_call.1} parent=1 // pred_check_branch
      %1660 = sbr.rel (0) target = $region37
    $region36: #{tpu_custom_call.1} parent=1 // pred_region
      %1662 = vsyncadd [#allocation6], 0
      %s1663 = sshll.u32 [#allocation7], 4
      %s1664 = int_to_ptr.vmem [resolvable:$true] %s1663
      %s1665 = sshll.u32 %s8, 4
      %s1666 = int_to_ptr.hbm [resolvable:$true] %s1665
      %1671 = dma.vmem_to_hbm [thread:$0]  %s1664, 256, %s1666, [#allocation6], 128, 128, 8
    $region37: #{tpu_custom_call.1} parent=1 // pred_fallthru
      _
    // Predicated region
    $region38: #{tpu_custom_call.1} parent=1 // pred_check
      _
    $region39: #{tpu_custom_call.1} parent=1 // pred_check_branch
      %1673 = sbr.rel (0) target = $region41
    $region40: #{tpu_custom_call.1} parent=1 // pred_region
      %1675 = dma.done [#allocation4], 1024
    $region41: #{tpu_custom_call.1} parent=1 // pred_fallthru
      _
    // Predicated region
    $region42: #{tpu_custom_call.1} parent=1 // pred_check
      _
    $region43: #{tpu_custom_call.1} parent=1 // pred_check_branch
      %1677 = sbr.rel (0) target = $region45
    $region44: #{tpu_custom_call.1} parent=1 // pred_region
      %1679 = dma.done [#allocation6], 256
    $region45: #{tpu_custom_call.1} parent=1 // pred_fallthru
      _
    // Predicated region
    $region46: #{tpu_custom_call.1} parent=1 // pred_check
      _
    $region47: #{tpu_custom_call.1} parent=1 // pred_check_branch
      %1681 = sbr.rel (0) target = $region49
    $region48: #{tpu_custom_call.1} parent=1 // pred_region
      %1683 = dma.done [#allocation6], 256
    $region49: #{tpu_custom_call.1} parent=1 // pred_fallthru
      _
    %1684 = vsyncpa [#allocation4], 1
    %1685 = vsyncpa [#allocation6], 1

</llo_original>
